<compile_context>
chip_gen: v6e
topology: v6e:2x2x1
jax: 0.10.0
libtpu: 0.0.40
codegen_flags: <defaults>
</compile_context>

<pallas_src>
import functools

import jax
import jax.numpy as jnp
from jax.experimental import pallas as pl
from jax.experimental.pallas import tpu as pltpu


def _cdiv(a, b):
    return -(-a // b)


def _round_up(x, m):
    return _cdiv(x, m) * m


def _vmem_budget_bytes():
    """Conservative scoped-VMEM budget that is safe on v5e/v6e/v7x."""
    try:
        cap = pltpu.get_tpu_info().vmem_capacity_bytes
        return int(cap * 0.6)
    except Exception:
        # v7x has only 64 MiB VMEM per TensorCore -> stay well under that.
        return 48 * 1024 * 1024


def _estimate_vmem(tm, tn, tk, kp, in_bytes, out_bytes):
    w = 2 * tk * tn * in_bytes          # double-buffered weight tile (dominant)
    x = 2 * tm * kp * in_bytes          # K-resident activation slab
    b = 2 * tn * in_bytes               # bias tile
    o = 2 * tm * tn * out_bytes         # output tile
    acc = tm * tn * 4                   # f32 accumulator scratch
    return w + x + b + o + acc


def _pick_tiles(N, K, in_bytes, out_bytes, budget, *, max_tn=1024, max_tk=2048):
    tm = 8                               # batch stays tiny; workload is HBM-bound
    n128 = _round_up(N, 128)
    k128 = _round_up(K, 128)
    # N tile: as large as possible (<= max_tn), padding spread evenly, but keep
    # >= 2 j blocks when N allows so megacore (v7x, 2 TCs) can shard axis j.
    nb_n = max(_cdiv(n128, max_tn), 2 if n128 > 128 else 1)
    tn = _round_up(_cdiv(n128, nb_n), 128)
    # K tile: as large as possible (<= max_tk), shrunk until VMEM fits budget.
    nb_k = _cdiv(k128, max_tk)
    tk = _round_up(_cdiv(k128, nb_k), 128)
    while (_estimate_vmem(tm, tn, tk, nb_k * tk, in_bytes, out_bytes) > budget
           and tk > 256):
        nb_k += 1
        tk = _round_up(_cdiv(k128, nb_k), 128)
    return tm, tn, tk


# ----------------------------------------------------------------------------
# Pallas tiled linear: y = x @ w + b
#   x: (M, K)   w: (K, N)   b: (1, N)   y: (M, N)
# Grid = (M/tm, N/tn, K/tk); reduction axis (k) last / "arbitrary".
# x is K-resident (one (tm, K) block per i); f32 accumulator in VMEM scratch;
# bias added once on the final k step.
# ----------------------------------------------------------------------------
def _linear_kernel(x_ref, w_ref, b_ref, o_ref, acc_ref, *, tk):
    k = pl.program_id(2)

    @pl.when(k == 0)
    def _():
        acc_ref[...] = jnp.zeros_like(acc_ref)

    x_blk = x_ref[:, pl.ds(pl.multiple_of(k * tk, tk), tk)]
    acc_ref[...] += jnp.dot(x_blk, w_ref[...],
                            preferred_element_type=jnp.float32)

    @pl.when(k == pl.num_programs(2) - 1)
    def _():
        o_ref[...] = (acc_ref[...]
                      + b_ref[...].astype(jnp.float32)).astype(o_ref.dtype)


@functools.partial(jax.jit, static_argnames=("max_tn", "max_tk"))
def pallas_linear(x, w, b, *, max_tn=1024, max_tk=2048):
    M, K = x.shape
    K2, N = w.shape
    assert K == K2, (K, K2)

    in_bytes = x.dtype.itemsize
    out_bytes = x.dtype.itemsize
    budget = _vmem_budget_bytes()
    tm, tn, tk = _pick_tiles(N, K, in_bytes, out_bytes, budget,
                             max_tn=max_tn, max_tk=max_tk)

    Mp = _round_up(M, tm)
    Np = _round_up(N, tn)
    Kp = _round_up(K, tk)

    # Zero-pad to tile multiples (zero K padding is exact for x @ w).
    xp = x if (Mp == M and Kp == K) else jnp.pad(x, ((0, Mp - M), (0, Kp - K)))
    wp = w if (Kp == K and Np == N) else jnp.pad(w, ((0, Kp - K), (0, Np - N)))
    bp = (b if Np == N else jnp.pad(b, (0, Np - N)))
    bp = bp.reshape(1, Np).astype(x.dtype)

    grid = (Mp // tm, Np // tn, Kp // tk)

    flops = 2 * Mp * Np * Kp
    bytes_accessed = (xp.size * in_bytes + wp.size * in_bytes
                      + bp.size * in_bytes + Mp * Np * out_bytes)

    out = pl.pallas_call(
        functools.partial(_linear_kernel, tk=tk),
        out_shape=jax.ShapeDtypeStruct((Mp, Np), x.dtype),
        grid_spec=pltpu.PrefetchScalarGridSpec(
            num_scalar_prefetch=0,
            grid=grid,
            in_specs=[
                pl.BlockSpec((tm, Kp), lambda i, j, k: (i, 0)),   # x: K-resident
                pl.BlockSpec((tk, tn), lambda i, j, k: (k, j)),   # weight tile
                pl.BlockSpec((1, tn), lambda i, j, k: (0, j)),    # bias tile
            ],
            out_specs=pl.BlockSpec((tm, tn), lambda i, j, k: (i, j)),
            scratch_shapes=[pltpu.VMEM((tm, tn), jnp.float32)],
        ),
        compiler_params=pltpu.CompilerParams(
            dimension_semantics=("parallel", "parallel", "arbitrary"),
            vmem_limit_bytes=budget,
        ),
        cost_estimate=pl.CostEstimate(
            flops=flops, transcendentals=0, bytes_accessed=bytes_accessed),
    )(xp, wp, bp)

    return out[:M, :N]


# ----------------------------------------------------------------------------
# Net: fc1 -> fc2 -> fc3 -> fc4 (no activations, exactly like the PyTorch Net)
# ----------------------------------------------------------------------------
def init_net_params(key, dims, param_dtype=jnp.bfloat16):
    """dims = (d_in, h1, h2, h3, d_out); PyTorch-default-style uniform init,
    weights stored pre-transposed (in_features, out_features)."""
    params = []
    for fan_in, fan_out in zip(dims[:-1], dims[1:]):
        key, kw, kb = jax.random.split(key, 3)
        bound = 1.0 / jnp.sqrt(jnp.float32(fan_in))
        w = jax.random.uniform(kw, (fan_in, fan_out), jnp.float32,
                               minval=-bound, maxval=bound).astype(param_dtype)
        bvec = jax.random.uniform(kb, (fan_out,), jnp.float32,
                                  minval=-bound, maxval=bound).astype(param_dtype)
        params.append((w, bvec))
    return params


def net_forward(params, x):
    for (w, b) in params:
        x = pallas_linear(x, w, b)
    return x


def net_reference(params, x):
    """Plain-JAX reference using the same (bf16-rounded) params, f32 math,
    same per-layer output dtype as the kernel chain."""
    y = x
    for (w, b) in params:
        y32 = jnp.dot(y.astype(jnp.float32), w.astype(jnp.float32),
                      precision=jax.lax.Precision.HIGHEST) + b.astype(jnp.float32)
        y = y32.astype(x.dtype)
    return y


if __name__ == "__main__":
    # Scaled-down stand-ins for the real (10240, 30000, 30000, 30000, 1024) Net.
    D_IN, H1, H2, H3, D_OUT = 1024, 1536, 1536, 1536, 256
    BATCH = 8

    key = jax.random.PRNGKey(0)
    key, kx = jax.random.split(key)
    x = jax.random.normal(kx, (BATCH, D_IN), dtype=jnp.float32).astype(jnp.bfloat16)

    params = init_net_params(key, (D_IN, H1, H2, H3, D_OUT),
                             param_dtype=jnp.bfloat16)

    y = jax.block_until_ready(net_forward(params, x))
    y_ref = jax.block_until_ready(net_reference(params, x))
    assert y.shape == (BATCH, D_OUT)
    assert jnp.allclose(y.astype(jnp.float32), y_ref.astype(jnp.float32),
                        atol=2e-2, rtol=2e-2), "mismatch vs reference (bf16 net)"

    # Also exercise the padded (non-128-aligned) path, like the real 30000-wide
    # layers, in f32.
    key, kw2, kb2, kx2 = jax.random.split(key, 4)
    x2 = jax.random.normal(kx2, (5, 1000), dtype=jnp.float32)
    w2 = jax.random.normal(kw2, (1000, 300), dtype=jnp.float32) / jnp.sqrt(1000.0)
    b2 = jax.random.normal(kb2, (300,), dtype=jnp.float32) * 0.01
    y2 = jax.block_until_ready(pallas_linear(x2, w2, b2))
    y2_ref = x2 @ w2 + b2
    assert y2.shape == (5, 300)
    assert jnp.allclose(y2, y2_ref, atol=1e-2, rtol=1e-2), "padded-path mismatch"

    print("KERNEL_OK")
</pallas_src>

<mosaic_0001>
module attributes {stable_mosaic.version = 11 : i64} {
  func.func @_linear_kernel(%arg0: i32, %arg1: i32, %arg2: i32, %arg3: memref<8x1024xbf16, #tpu.memory_space<vmem>>, %arg4: memref<1024x768xbf16, #tpu.memory_space<vmem>>, %arg5: memref<1x768xbf16, #tpu.memory_space<vmem>>, %arg6: memref<8x768xbf16, #tpu.memory_space<vmem>>, %arg7: memref<8x768xf32, #tpu.memory_space<vmem>>) attributes {dimension_semantics = [#tpu.dimension_semantics<parallel>, #tpu.dimension_semantics<parallel>, #tpu.dimension_semantics<arbitrary>], iteration_bounds = array<i64: 1, 2, 1>, scalar_prefetch = 0 : i64, scratch_operands = 1 : i64, tpu.core_type = #tpu.core_type<tc>, window_params = [{transform_indices = @transform_0, window_bounds = array<i64: 8, 1024>}, {transform_indices = @transform_1, window_bounds = array<i64: 1024, 768>}, {transform_indices = @transform_2, window_bounds = array<i64: 1, 768>}, {transform_indices = @transform_3, window_bounds = array<i64: 8, 768>}]} {
    %c0_i32 = arith.constant 0 : i32
    %0 = arith.cmpi eq, %arg2, %c0_i32 : i32
    %1 = arith.extui %0 : i1 to i32
    %c0_i32_0 = arith.constant 0 : i32
    %2 = arith.cmpi ne, %1, %c0_i32_0 : i32
    scf.if %2 {
      %cst_9 = arith.constant 0.000000e+00 : f32
      %15 = vector.broadcast %cst_9 : f32 to vector<8x768xf32>
      %c0_10 = arith.constant 0 : index
      %c0_11 = arith.constant 0 : index
      %16 = vector.load %arg7[%c0_10, %c0_11] : memref<8x768xf32, #tpu.memory_space<vmem>>, vector<8x768xf32>
      tpu.vector_store %arg7[%c0_10, %c0_11], %15 {strides = array<i32>} : memref<8x768xf32, #tpu.memory_space<vmem>>, vector<8x768xf32>,
    } else {
    }
    %c1024_i32 = arith.constant 1024 : i32
    %3 = arith.muli %arg2, %c1024_i32 : i32
    %4 = tpu.assume_multiple %3, 1024 : i32
    %c0 = arith.constant 0 : index
    %5 = arith.index_cast %4 : i32 to index
    %6 = vector.load %arg3[%c0, %5] : memref<8x1024xbf16, #tpu.memory_space<vmem>>, vector<8x1024xbf16>
    %c0_1 = arith.constant 0 : index
    %c0_2 = arith.constant 0 : index
    %7 = vector.load %arg7[%c0_1, %c0_2] : memref<8x768xf32, #tpu.memory_space<vmem>>, vector<8x768xf32>
    %c0_3 = arith.constant 0 : index
    %c0_4 = arith.constant 0 : index
    %8 = vector.load %arg4[%c0_3, %c0_4] : memref<1024x768xbf16, #tpu.memory_space<vmem>>, vector<1024x768xbf16>
    %cst = arith.constant dense<0.000000e+00> : vector<8x768xf32>
    %9 = tpu.matmul %6, %8, %cst {dimension_numbers = #tpu.dot_dimension_numbers<[1], [0], [0], [1], [0, 0, 1, 1], [], []>} : vector<8x1024xbf16>, vector<1024x768xbf16>, vector<8x768xf32> -> vector<8x768xf32>
    %10 = arith.addf %7, %9 : vector<8x768xf32>
    %c0_5 = arith.constant 0 : index
    %c0_6 = arith.constant 0 : index
    %11 = vector.load %arg7[%c0_5, %c0_6] : memref<8x768xf32, #tpu.memory_space<vmem>>, vector<8x768xf32>
    tpu.vector_store %arg7[%c0_5, %c0_6], %10 {strides = array<i32>} : memref<8x768xf32, #tpu.memory_space<vmem>>, vector<8x768xf32>,
    %c0_i32_7 = arith.constant 0 : i32
    %12 = arith.cmpi eq, %arg2, %c0_i32_7 : i32
    %13 = arith.extui %12 : i1 to i32
    %c0_i32_8 = arith.constant 0 : i32
    %14 = arith.cmpi ne, %13, %c0_i32_8 : i32
    scf.if %14 {
      %c0_9 = arith.constant 0 : index
      %c0_10 = arith.constant 0 : index
      %15 = vector.load %arg7[%c0_9, %c0_10] : memref<8x768xf32, #tpu.memory_space<vmem>>, vector<8x768xf32>
      %c0_11 = arith.constant 0 : index
      %c0_12 = arith.constant 0 : index
      %16 = vector.load %arg5[%c0_11, %c0_12] : memref<1x768xbf16, #tpu.memory_space<vmem>>, vector<1x768xbf16>
      %17 = arith.extf %16 : vector<1x768xbf16> to vector<1x768xf32>
      %18 = vector.broadcast %17 : vector<1x768xf32> to vector<8x768xf32>
      %19 = arith.addf %15, %18 : vector<8x768xf32>
      %20 = arith.truncf %19 : vector<8x768xf32> to vector<8x768xbf16>
      %c0_13 = arith.constant 0 : index
      %c0_14 = arith.constant 0 : index
      %21 = vector.load %arg6[%c0_13, %c0_14] : memref<8x768xbf16, #tpu.memory_space<vmem>>, vector<8x768xbf16>
      tpu.vector_store %arg6[%c0_13, %c0_14], %20 {strides = array<i32>} : memref<8x768xbf16, #tpu.memory_space<vmem>>, vector<8x768xbf16>,
    } else {
    }
    return
  }
  func.func @transform_0(%arg0: i32, %arg1: i32, %arg2: i32) -> (i32, i32) {
    %c0_i32 = arith.constant 0 : i32
    %c0_i32_0 = arith.constant 0 : i32
    return %arg0, %c0_i32 : i32, i32
  }
  func.func @transform_1(%arg0: i32, %arg1: i32, %arg2: i32) -> (i32, i32) {
    %c0_i32 = arith.constant 0 : i32
    return %arg2, %arg1 : i32, i32
  }
  func.func @transform_2(%arg0: i32, %arg1: i32, %arg2: i32) -> (i32, i32) {
    %c0_i32 = arith.constant 0 : i32
    %c0_i32_0 = arith.constant 0 : i32
    return %c0_i32, %arg1 : i32, i32
  }
  func.func @transform_3(%arg0: i32, %arg1: i32, %arg2: i32) -> (i32, i32) {
    %c0_i32 = arith.constant 0 : i32
    return %arg0, %arg1 : i32, i32
  }
}

</mosaic_0001>

<llo_original>
// kernel: pallas_linear.1
$region0: #{pallas_linear.1}
  #allocation0 [shape = 'u32[]', space=smem, size = 0x4, offset = 0x4, fixed_abs, tag = 'smem constant byte address 0x4 - core index']
  #allocation1 [shape = 'u32[144,128]{1,0:T(1,128)}', space=vmem, size = 0x12000, scoped, tag = 'internal scratch']
  #allocation2 [shape = 'f32[8,768]{1,0:T(8,128)}', space=vmem, size = 0x6000, scoped, tag = 'scratch operand']
  %s0 = inlined_call_operand.hbm [shape: bf16[8,1024], index: 0, kind: input, shape index: {}]
  %s1 = inlined_call_operand.hbm [shape: bf16[1024,1536], index: 1, kind: input, shape index: {}]
  %s2 = inlined_call_operand.vmem [shape: bf16[1,1536], index: 2, kind: input, shape index: {}]
  %s3 = inlined_call_operand.hbm [shape: bf16[8,1536], index: 3, kind: output, shape index: {}]
  %s4 = sld [smem:[#allocation0]]
  $region61: #{pallas_linear.1} parent=0
    _
  %s6 = ssub.s32 1, %s4
  %s7 = scalar_select 0, %s6, %s4
  $region1: #{pallas_linear.1} parent=0
    #allocation3 [shape = 'u8[16384]{0}', space=vmem, size = 0x4000, scoped, tag = 'input window, operand 0, single buffered']
    #allocation4 [shape = 's32[2]{0}', space=sflag, size = 0x8, scoped, tag = 'scoped memory for pallas_linear.1']
    #allocation5 [shape = 's32[2]{0}', space=sflag, size = 0x8, scoped, tag = 'scoped memory for pallas_linear.1']
    #allocation6 [shape = 'u8[3145728]{0}', space=vmem, size = 0x300000, scoped, tag = 'input window, operand 1']
    #allocation7 [shape = 's32[2]{0}', space=sflag, size = 0x8, scoped, tag = 'scoped memory for pallas_linear.1']
    #allocation8 [shape = 'u8[24576]{0}', space=vmem, size = 0x6000, scoped, tag = 'output window, operand 0']
    %8 = vsyncpa [#allocation4], 0
    %9 = vsyncpa [#allocation7], 0
    %s10 = scalar_lea.sflag [#allocation7], 1
    %11 = vsyncpa %s10, 0
    %12 = vsyncpa [#allocation5], 0
    %s13 = scalar_lea.sflag [#allocation5], 1
    %14 = vsyncpa %s13, 0
    loop: start=0, step=1, limit=4
    $region2: #{pallas_linear.1} parent=1 // loop_pre_header
      _
    $region3: #{pallas_linear.1} parent=1 // loop_header
      %s16 = sphi 0, %s20
      %p17 = scmp.ge.s32.totalorder %s16, 4
      %s23 = sphi 0, %s42
      %s24 = sphi 0, %s38
      %s25 = sphi 0, %s34
      %s26 = sphi 0, %s23
      %s27 = sphi 0, %s24
      %s28 = sphi 0, %s25
      %s29 = sphi 0, %s26
      %s30 = sphi 0, %s27
      %s31 = sphi 0, %s28
      %s45 = sphi 0, %s47
      %s48 = sphi 0, %s45
      %s49 = sphi 0, %s48
      %s65 = sphi 0, %s49
      %s73 = sphi 0, %s75
      %s76 = sphi 0, %s73
      %s77 = sphi 0, %s76
      %s93 = sphi 0, %s77
      %s99 = sphi 0, %s101
      %s102 = sphi 0, %s99
      %s103 = sphi 0, %s102
      %s119 = sphi 0, %s103
      %s127 = sphi 0, %s129
      %s130 = sphi 0, %s127
      %s131 = sphi 0, %s130
      %s147 = sphi 0, %s131
    $region4: #{pallas_linear.1} parent=1 // loop_header_branch
      %19 = sbr.rel (%p17) target = $region8
    $region5: #{pallas_linear.1} parent=1 // loop_body
      %s21 = ssub.s32 %s16, 1
      %s22 = ssub.s32 %s16, 2
      %s32 = sadd.s32 1, %s25
      %p33 = scmp.ge.s32.totalorder %s32, 1
      %s34 = scalar_select %p33, 0, %s32
      %s35 = sadd.s32 1, %s24
      %s36 = scalar_select %p33, %s35, %s24
      %p37 = scmp.ge.s32.totalorder %s36, 2
      %s38 = scalar_select %p37, 0, %s36
      %s39 = sadd.s32 1, %s23
      %s40 = scalar_select %p37, %s39, %s23
      %p41 = scmp.ge.s32.totalorder %s40, 1
      %s42 = scalar_select %p41, 0, %s40
      %s43 = ssub.s32 %s23, %s42
      %p44 = scmp.eq.s32.totalorder %s43, 0
      %s46 = sadd.s32 %s45, 1
      %s47 = scalar_select %p44, %s45, %s46
      %p50 = pneg %p44
      %p51 = scmp.eq.s32.totalorder %s16, 1
      %p52 = por %p50, %p51
      %p53 = scmp.ne.s32.totalorder %s45, %s48
      %p54 = scmp.eq.s32.totalorder %s16, 0
      %p55 = por %p53, %p54
      %p56 = scmp.ne.s32.totalorder %s45, %s48
      %p57 = scmp.eq.s32.totalorder %s21, 1
      %p58 = por %p56, %p57
      %p59 = scmp.ne.s32.totalorder %s48, %s49
      %p60 = scmp.eq.s32.totalorder %s21, 0
      %p61 = por %p59, %p60
      %p62 = scmp.ne.s32.totalorder %s48, %s49
      %p63 = scmp.eq.s32.totalorder %s22, 1
      %p64 = por %p62, %p63
      %p66 = scmp.ne.s32.totalorder %s49, %s65
      %p67 = scmp.eq.s32.totalorder %s22, 0
      %p68 = por %p66, %p67
      %s69 = ssub.s32 %s25, %s34
      %s70 = ssub.s32 %s24, %s38
      %s71 = sor.u32 %s69, %s70
      %p72 = scmp.eq.s32.totalorder %s71, 0
      %s74 = sadd.s32 %s73, 1
      %s75 = scalar_select %p72, %s73, %s74
      %p78 = pneg %p72
      %p79 = scmp.eq.s32.totalorder %s16, 1
      %p80 = por %p78, %p79
      %p81 = scmp.ne.s32.totalorder %s73, %s76
      %p82 = scmp.eq.s32.totalorder %s16, 0
      %p83 = por %p81, %p82
      %p84 = scmp.ne.s32.totalorder %s73, %s76
      %p85 = scmp.eq.s32.totalorder %s21, 1
      %p86 = por %p84, %p85
      %p87 = scmp.ne.s32.totalorder %s76, %s77
      %p88 = scmp.eq.s32.totalorder %s21, 0
      %p89 = por %p87, %p88
      %p90 = scmp.ne.s32.totalorder %s76, %s77
      %p91 = scmp.eq.s32.totalorder %s22, 1
      %p92 = por %p90, %p91
      %p94 = scmp.ne.s32.totalorder %s77, %s93
      %p95 = scmp.eq.s32.totalorder %s22, 0
      %p96 = por %p94, %p95
      %s97 = ssub.s32 %s24, %s38
      %p98 = scmp.eq.s32.totalorder %s97, 0
      %s100 = sadd.s32 %s99, 1
      %s101 = scalar_select %p98, %s99, %s100
      %p104 = pneg %p98
      %p105 = scmp.eq.s32.totalorder %s16, 1
      %p106 = por %p104, %p105
      %p107 = scmp.ne.s32.totalorder %s99, %s102
      %p108 = scmp.eq.s32.totalorder %s16, 0
      %p109 = por %p107, %p108
      %p110 = scmp.ne.s32.totalorder %s99, %s102
      %p111 = scmp.eq.s32.totalorder %s21, 1
      %p112 = por %p110, %p111
      %p113 = scmp.ne.s32.totalorder %s102, %s103
      %p114 = scmp.eq.s32.totalorder %s21, 0
      %p115 = por %p113, %p114
      %p116 = scmp.ne.s32.totalorder %s102, %s103
      %p117 = scmp.eq.s32.totalorder %s22, 1
      %p118 = por %p116, %p117
      %p120 = scmp.ne.s32.totalorder %s103, %s119
      %p121 = scmp.eq.s32.totalorder %s22, 0
      %p122 = por %p120, %p121
      %s123 = ssub.s32 %s23, %s42
      %s124 = ssub.s32 %s24, %s38
      %s125 = sor.u32 %s123, %s124
      %p126 = scmp.eq.s32.totalorder %s125, 0
      %s128 = sadd.s32 %s127, 1
      %s129 = scalar_select %p126, %s127, %s128
      %p132 = pneg %p126
      %p133 = scmp.eq.s32.totalorder %s16, 1
      %p134 = por %p132, %p133
      %p135 = scmp.ne.s32.totalorder %s127, %s130
      %p136 = scmp.eq.s32.totalorder %s16, 0
      %p137 = por %p135, %p136
      %p138 = scmp.ne.s32.totalorder %s127, %s130
      %p139 = scmp.eq.s32.totalorder %s21, 1
      %p140 = por %p138, %p139
      %p141 = scmp.ne.s32.totalorder %s130, %s131
      %p142 = scmp.eq.s32.totalorder %s21, 0
      %p143 = por %p141, %p142
      %p144 = scmp.ne.s32.totalorder %s130, %s131
      %p145 = scmp.eq.s32.totalorder %s22, 1
      %p146 = por %p144, %p145
      %p148 = scmp.ne.s32.totalorder %s131, %s147
      %p149 = scmp.eq.s32.totalorder %s22, 0
      %p150 = por %p148, %p149
      %p151 = scmp.le.s32.totalorder 1, %s16
      %p152 = scmp.lt.s32.totalorder %s16, 3
      %p153 = pnand %p151, %p152
      %p154 = pneg %p153
      // Predicated region
      $region9: #{pallas_linear.1} parent=5 // pred_check
        _
      $region10: #{pallas_linear.1} parent=5 // pred_check_branch
        %156 = sbr.rel (%p153) target = $region12
      $region11: #{pallas_linear.1} parent=5 // pred_region
        %s157 = ssub.s32 %s16, 1
        // Predicated region
        $region13: #{pallas_linear.1} parent=11 // pred_check
          %p158 = pneg %p61
        $region14: #{pallas_linear.1} parent=11 // pred_check_branch
          %160 = sbr.rel (%p158) target = $region16
        $region15: #{pallas_linear.1} parent=11 // pred_region
          %s162 = ssub.s32 512, 512
          %163 = vsyncadd [#allocation4], %s162
          %s164 = smul.addr %s26, 8
          %s165 = smul.addr %s164, 64
          %s166 = scalar_lea.hbm %s0, %s165
          %s168 = sshll.u32 [#allocation3], 4
          %s169 = int_to_ptr.vmem [resolvable:$true] %s168
          %171 = dma.hbm_to_vmem [thread:$0]  %s166, 512, %s169, [#allocation4]
        $region16: #{pallas_linear.1} parent=11 // pred_fallthru
          _
      $region12: #{pallas_linear.1} parent=5 // pred_fallthru
        _
      %p172 = scmp.lt.s32.totalorder %s16, 2
      // Predicated region
      $region17: #{pallas_linear.1} parent=5 // pred_check
        %p173 = pneg %p172
      $region18: #{pallas_linear.1} parent=5 // pred_check_branch
        %175 = sbr.rel (%p173) target = $region20
      $region19: #{pallas_linear.1} parent=5 // pred_region
        // Predicated region
        $region21: #{pallas_linear.1} parent=19 // pred_check
          %p176 = pneg %p83
        $region22: #{pallas_linear.1} parent=19 // pred_check_branch
          %178 = sbr.rel (%p176) target = $region24
        $region23: #{pallas_linear.1} parent=19 // pred_region
          %s179 = sand.u32 %s73, 1
          %s180 = scalar_lea.sflag [#allocation7], %s179
          %s181 = sand.u32 %s73, 1
          %s182 = smul.addr %s181, 3072
          %s183 = scalar_lea.vmem [#allocation6], %s182
          %s184 = smul.u32 128, %s25
          %s185 = smul.u32 6, %s24
          %s187 = ssub.s32 49152, 49152
          %188 = vsyncadd %s180, %s187
          %s189 = smul.addr %s184, 12
          %s190 = sadd.s32 %s185, %s189
          %s191 = smul.addr %s190, 64
          %s192 = scalar_lea.hbm %s1, %s191
          %s193 = sshll.u32 %s183, 4
          %s194 = int_to_ptr.vmem [resolvable:$true] %s193
          %199 = dma.hbm_to_vmem [thread:$0]  %s192, 49152, %s194, %s180, 768, 384, 24
        $region24: #{pallas_linear.1} parent=19 // pred_fallthru
          _
        // Predicated region
        $region25: #{pallas_linear.1} parent=19 // pred_check
          %p200 = pneg %p109
        $region26: #{pallas_linear.1} parent=19 // pred_check_branch
          %202 = sbr.rel (%p200) target = $region28
        $region27: #{pallas_linear.1} parent=19 // pred_region
          %s203 = smul.u32 6, %s24
          %p204 = scmp.lt.s32.totalorder %s203, 11
          %s205 = scalar_select %p204, %s203, 11
          %s206 = scalar_lea.vmem %s2, %s205
          %s207 = smul.u32 6, %s24
        $region28: #{pallas_linear.1} parent=19 // pred_fallthru
          _
      $region20: #{pallas_linear.1} parent=5 // pred_fallthru
        _
      %p208 = scmp.le.s32.totalorder 1, %s16
      %p209 = scmp.lt.s32.totalorder %s16, 3
      %p210 = pnand %p208, %p209
      %p211 = pneg %p210
      // Predicated region
      $region29: #{pallas_linear.1} parent=5 // pred_check
        _
      $region30: #{pallas_linear.1} parent=5 // pred_check_branch
        %213 = sbr.rel (%p210) target = $region32
      $region31: #{pallas_linear.1} parent=5 // pred_region
        %s214 = ssub.s32 %s16, 1
        // Predicated region
        $region33: #{pallas_linear.1} parent=31 // pred_check
          %p215 = pneg %p61
        $region34: #{pallas_linear.1} parent=31 // pred_check_branch
          %217 = sbr.rel (%p215) target = $region36
        $region35: #{pallas_linear.1} parent=31 // pred_region
          %218 = dma.done [#allocation4], 512
        $region36: #{pallas_linear.1} parent=31 // pred_fallthru
          _
        %s219 = sand.u32 %s76, 1
        %s220 = scalar_lea.sflag [#allocation7], %s219
        %s221 = sand.u32 %s76, 1
        %s222 = smul.addr %s221, 3072
        %s223 = scalar_lea.vmem [#allocation6], %s222
        // Predicated region
        $region37: #{pallas_linear.1} parent=31 // pred_check
          %p224 = pneg %p89
        $region38: #{pallas_linear.1} parent=31 // pred_check_branch
          %226 = sbr.rel (%p224) target = $region40
        $region39: #{pallas_linear.1} parent=31 // pred_region
          %227 = dma.done %s220, 49152
        $region40: #{pallas_linear.1} parent=31 // pred_fallthru
          _
        %p228 = pneg %p61
        %p229 = pneg %p58
        %s230 = sand.u32 %s76, 1
        %s231 = scalar_lea.sflag [#allocation7], %s230
        %s232 = sand.u32 %s76, 1
        %s233 = smul.addr %s232, 3072
        %s234 = scalar_lea.vmem [#allocation6], %s233
        %p235 = pneg %p89
        %p236 = pneg %p86
        %s237 = smul.u32 6, %s27
        %p238 = scmp.lt.s32.totalorder %s237, 11
        %s239 = scalar_select %p238, %s237, 11
        %s240 = scalar_lea.vmem %s2, %s239
        %p241 = pneg %p115
        %p242 = pneg %p112
        %p243 = pneg %p143
        %p244 = pneg %p140
        %s245 = sand.u32 %s130, 1
        %s246 = scalar_lea.sflag [#allocation5], %s245
        %s247 = sand.u32 %s130, 1
        %s248 = smul.addr %s247, 24
        %s249 = scalar_lea.vmem [#allocation8], %s248
        %s250 = smul.u32 128, %s28
        %s251 = smul.u32 6, %s27
        %s252 = smul.u32 6, %s27
        %p253 = scmp.lt.s32.totalorder %s252, 11
        %s254 = scalar_select %p253, %s252, 11
        %s255 = scalar_lea.vmem %s2, %s254
        %s256 = smul.u32 6, %s27
        %s257 = smul.u32 6, %s27
        %p258 = scmp.eq.s32.totalorder %s28, 0
        // Predicated region
        $region41: #{pallas_linear.1} parent=31 // pred_check
          %p259 = pneg %p258
        $region42: #{pallas_linear.1} parent=31 // pred_check_branch
          %261 = sbr.rel (%p259) target = $region44
        $region43: #{pallas_linear.1} parent=31 // pred_region
          %262 = vst [vmem:[#allocation2] sm:$0xff] 0.0
          %263 = vst [vmem:[#allocation2 + $0x8] sm:$0xff] 0.0
          %264 = vst [vmem:[#allocation2 + $0x10] sm:$0xff] 0.0
          %265 = vst [vmem:[#allocation2 + $0x18] sm:$0xff] 0.0
          %266 = vst [vmem:[#allocation2 + $0x20] sm:$0xff] 0.0
          %267 = vst [vmem:[#allocation2 + $0x28] sm:$0xff] 0.0
        $region44: #{pallas_linear.1} parent=31 // pred_fallthru
          _
        %s268 = smul.u32 %s28, 1024
        %s269 = sshra.s32 %s268, 7
        %s270 = sand.u32 %s268, 127
        %s271 = smul.addr %s269, 4
        %s272 = scalar_lea.vmem [#allocation3], %s271
        %v273 = vld [vmem:[%s272] sm:$0xff]
        %v274 = vld [vmem:[%s272 + $0x8] sm:$0xff]
        %v275 = vld [vmem:[%s272 + $0x10] sm:$0xff]
        %v276 = vld [vmem:[%s272 + $0x18] sm:$0xff]
        %v277 = vld [vmem:[#allocation2] sm:$0xff]
        %v278 = vld [vmem:[#allocation2 + $0x8] sm:$0xff]
        %v279 = vld [vmem:[#allocation2 + $0x10] sm:$0xff]
        %v280 = vld [vmem:[#allocation2 + $0x18] sm:$0xff]
        %v281 = vld [vmem:[#allocation2 + $0x20] sm:$0xff]
        %v282 = vld [vmem:[#allocation2 + $0x28] sm:$0xff]
        %v283 = vld [vmem:[%s223] sm:$0xff]
        %v284 = vld [vmem:[%s223 + $0x8] sm:$0xff]
        %v285 = vld [vmem:[%s223 + $0x10] sm:$0xff]
        %v286 = vld [vmem:[%s223 + $0x18] sm:$0xff]
        %v287 = vld [vmem:[%s223 + $0x20] sm:$0xff]
        %v288 = vld [vmem:[%s223 + $0x28] sm:$0xff]
        %v289 = vld [vmem:[%s223 + $0x30] sm:$0xff]
        %v290 = vld [vmem:[%s223 + $0x38] sm:$0xff]
        %v291 = vld [vmem:[%s223 + $0x40] sm:$0xff]
        %v292 = vld [vmem:[%s223 + $0x48] sm:$0xff]
        %v293 = vld [vmem:[%s223 + $0x50] sm:$0xff]
        %v294 = vld [vmem:[%s223 + $0x58] sm:$0xff]
        %v295 = vld [vmem:[%s223 + $0x60] sm:$0xff]
        %v296 = vld [vmem:[%s223 + $0x68] sm:$0xff]
        %v297 = vld [vmem:[%s223 + $0x70] sm:$0xff]
        %v298 = vld [vmem:[%s223 + $0x78] sm:$0xff]
        %v299 = vld [vmem:[%s223 + $0x80] sm:$0xff]
        %v300 = vld [vmem:[%s223 + $0x88] sm:$0xff]
        %v301 = vld [vmem:[%s223 + $0x90] sm:$0xff]
        %v302 = vld [vmem:[%s223 + $0x98] sm:$0xff]
        %v303 = vld [vmem:[%s223 + $0xa0] sm:$0xff]
        %v304 = vld [vmem:[%s223 + $0xa8] sm:$0xff]
        %v305 = vld [vmem:[%s223 + $0xb0] sm:$0xff]
        %v306 = vld [vmem:[%s223 + $0xb8] sm:$0xff]
        %v307 = vld [vmem:[%s223 + $0xc0] sm:$0xff]
        %v308 = vld [vmem:[%s223 + $0xc8] sm:$0xff]
        %v309 = vld [vmem:[%s223 + $0xd0] sm:$0xff]
        %v310 = vld [vmem:[%s223 + $0xd8] sm:$0xff]
        %v311 = vld [vmem:[%s223 + $0xe0] sm:$0xff]
        %v312 = vld [vmem:[%s223 + $0xe8] sm:$0xff]
        %v313 = vld [vmem:[%s223 + $0xf0] sm:$0xff]
        %v314 = vld [vmem:[%s223 + $0xf8] sm:$0xff]
        %v315 = vld [vmem:[%s223 + $0x100] sm:$0xff]
        %v316 = vld [vmem:[%s223 + $0x108] sm:$0xff]
        %v317 = vld [vmem:[%s223 + $0x110] sm:$0xff]
        %v318 = vld [vmem:[%s223 + $0x118] sm:$0xff]
        %v319 = vld [vmem:[%s223 + $0x120] sm:$0xff]
        %v320 = vld [vmem:[%s223 + $0x128] sm:$0xff]
        %v321 = vld [vmem:[%s223 + $0x130] sm:$0xff]
        %v322 = vld [vmem:[%s223 + $0x138] sm:$0xff]
        %v323 = vld [vmem:[%s223 + $0x140] sm:$0xff]
        %v324 = vld [vmem:[%s223 + $0x148] sm:$0xff]
        %v325 = vld [vmem:[%s223 + $0x150] sm:$0xff]
        %v326 = vld [vmem:[%s223 + $0x158] sm:$0xff]
        %v327 = vld [vmem:[%s223 + $0x160] sm:$0xff]
        %v328 = vld [vmem:[%s223 + $0x168] sm:$0xff]
        %v329 = vld [vmem:[%s223 + $0x170] sm:$0xff]
        %v330 = vld [vmem:[%s223 + $0x178] sm:$0xff]
        %v331 = vld [vmem:[%s223 + $0x180] sm:$0xff]
        %v332 = vld [vmem:[%s223 + $0x188] sm:$0xff]
        %v333 = vld [vmem:[%s223 + $0x190] sm:$0xff]
        %v334 = vld [vmem:[%s223 + $0x198] sm:$0xff]
        %v335 = vld [vmem:[%s223 + $0x1a0] sm:$0xff]
        %v336 = vld [vmem:[%s223 + $0x1a8] sm:$0xff]
        %v337 = vld [vmem:[%s223 + $0x1b0] sm:$0xff]
        %v338 = vld [vmem:[%s223 + $0x1b8] sm:$0xff]
        %v339 = vld [vmem:[%s223 + $0x1c0] sm:$0xff]
        %v340 = vld [vmem:[%s223 + $0x1c8] sm:$0xff]
        %v341 = vld [vmem:[%s223 + $0x1d0] sm:$0xff]
        %v342 = vld [vmem:[%s223 + $0x1d8] sm:$0xff]
        %v343 = vld [vmem:[%s223 + $0x1e0] sm:$0xff]
        %v344 = vld [vmem:[%s223 + $0x1e8] sm:$0xff]
        %v345 = vld [vmem:[%s223 + $0x1f0] sm:$0xff]
        %v346 = vld [vmem:[%s223 + $0x1f8] sm:$0xff]
        %v347 = vld [vmem:[%s223 + $0x200] sm:$0xff]
        %v348 = vld [vmem:[%s223 + $0x208] sm:$0xff]
        %v349 = vld [vmem:[%s223 + $0x210] sm:$0xff]
        %v350 = vld [vmem:[%s223 + $0x218] sm:$0xff]
        %v351 = vld [vmem:[%s223 + $0x220] sm:$0xff]
        %v352 = vld [vmem:[%s223 + $0x228] sm:$0xff]
        %v353 = vld [vmem:[%s223 + $0x230] sm:$0xff]
        %v354 = vld [vmem:[%s223 + $0x238] sm:$0xff]
        %v355 = vld [vmem:[%s223 + $0x240] sm:$0xff]
        %v356 = vld [vmem:[%s223 + $0x248] sm:$0xff]
        %v357 = vld [vmem:[%s223 + $0x250] sm:$0xff]
        %v358 = vld [vmem:[%s223 + $0x258] sm:$0xff]
        %v359 = vld [vmem:[%s223 + $0x260] sm:$0xff]
        %v360 = vld [vmem:[%s223 + $0x268] sm:$0xff]
        %v361 = vld [vmem:[%s223 + $0x270] sm:$0xff]
        %v362 = vld [vmem:[%s223 + $0x278] sm:$0xff]
        %v363 = vld [vmem:[%s223 + $0x280] sm:$0xff]
        %v364 = vld [vmem:[%s223 + $0x288] sm:$0xff]
        %v365 = vld [vmem:[%s223 + $0x290] sm:$0xff]
        %v366 = vld [vmem:[%s223 + $0x298] sm:$0xff]
        %v367 = vld [vmem:[%s223 + $0x2a0] sm:$0xff]
        %v368 = vld [vmem:[%s223 + $0x2a8] sm:$0xff]
        %v369 = vld [vmem:[%s223 + $0x2b0] sm:$0xff]
        %v370 = vld [vmem:[%s223 + $0x2b8] sm:$0xff]
        %v371 = vld [vmem:[%s223 + $0x2c0] sm:$0xff]
        %v372 = vld [vmem:[%s223 + $0x2c8] sm:$0xff]
        %v373 = vld [vmem:[%s223 + $0x2d0] sm:$0xff]
        %v374 = vld [vmem:[%s223 + $0x2d8] sm:$0xff]
        %v375 = vld [vmem:[%s223 + $0x2e0] sm:$0xff]
        %v376 = vld [vmem:[%s223 + $0x2e8] sm:$0xff]
        %v377 = vld [vmem:[%s223 + $0x2f0] sm:$0xff]
        %v378 = vld [vmem:[%s223 + $0x2f8] sm:$0xff]
        %v379 = vld [vmem:[%s223 + $0x300] sm:$0xff]
        %v380 = vld [vmem:[%s223 + $0x308] sm:$0xff]
        %v381 = vld [vmem:[%s223 + $0x310] sm:$0xff]
        %v382 = vld [vmem:[%s223 + $0x318] sm:$0xff]
        %v383 = vld [vmem:[%s223 + $0x320] sm:$0xff]
        %v384 = vld [vmem:[%s223 + $0x328] sm:$0xff]
        %v385 = vld [vmem:[%s223 + $0x330] sm:$0xff]
        %v386 = vld [vmem:[%s223 + $0x338] sm:$0xff]
        %v387 = vld [vmem:[%s223 + $0x340] sm:$0xff]
        %v388 = vld [vmem:[%s223 + $0x348] sm:$0xff]
        %v389 = vld [vmem:[%s223 + $0x350] sm:$0xff]
        %v390 = vld [vmem:[%s223 + $0x358] sm:$0xff]
        %v391 = vld [vmem:[%s223 + $0x360] sm:$0xff]
        %v392 = vld [vmem:[%s223 + $0x368] sm:$0xff]
        %v393 = vld [vmem:[%s223 + $0x370] sm:$0xff]
        %v394 = vld [vmem:[%s223 + $0x378] sm:$0xff]
        %v395 = vld [vmem:[%s223 + $0x380] sm:$0xff]
        %v396 = vld [vmem:[%s223 + $0x388] sm:$0xff]
        %v397 = vld [vmem:[%s223 + $0x390] sm:$0xff]
        %v398 = vld [vmem:[%s223 + $0x398] sm:$0xff]
        %v399 = vld [vmem:[%s223 + $0x3a0] sm:$0xff]
        %v400 = vld [vmem:[%s223 + $0x3a8] sm:$0xff]
        %v401 = vld [vmem:[%s223 + $0x3b0] sm:$0xff]
        %v402 = vld [vmem:[%s223 + $0x3b8] sm:$0xff]
        %v403 = vld [vmem:[%s223 + $0x3c0] sm:$0xff]
        %v404 = vld [vmem:[%s223 + $0x3c8] sm:$0xff]
        %v405 = vld [vmem:[%s223 + $0x3d0] sm:$0xff]
        %v406 = vld [vmem:[%s223 + $0x3d8] sm:$0xff]
        %v407 = vld [vmem:[%s223 + $0x3e0] sm:$0xff]
        %v408 = vld [vmem:[%s223 + $0x3e8] sm:$0xff]
        %v409 = vld [vmem:[%s223 + $0x3f0] sm:$0xff]
        %v410 = vld [vmem:[%s223 + $0x3f8] sm:$0xff]
        %v411 = vld [vmem:[%s223 + $0x400] sm:$0xff]
        %v412 = vld [vmem:[%s223 + $0x408] sm:$0xff]
        %v413 = vld [vmem:[%s223 + $0x410] sm:$0xff]
        %v414 = vld [vmem:[%s223 + $0x418] sm:$0xff]
        %v415 = vld [vmem:[%s223 + $0x420] sm:$0xff]
        %v416 = vld [vmem:[%s223 + $0x428] sm:$0xff]
        %v417 = vld [vmem:[%s223 + $0x430] sm:$0xff]
        %v418 = vld [vmem:[%s223 + $0x438] sm:$0xff]
        %v419 = vld [vmem:[%s223 + $0x440] sm:$0xff]
        %v420 = vld [vmem:[%s223 + $0x448] sm:$0xff]
        %v421 = vld [vmem:[%s223 + $0x450] sm:$0xff]
        %v422 = vld [vmem:[%s223 + $0x458] sm:$0xff]
        %v423 = vld [vmem:[%s223 + $0x460] sm:$0xff]
        %v424 = vld [vmem:[%s223 + $0x468] sm:$0xff]
        %v425 = vld [vmem:[%s223 + $0x470] sm:$0xff]
        %v426 = vld [vmem:[%s223 + $0x478] sm:$0xff]
        %v427 = vld [vmem:[%s223 + $0x480] sm:$0xff]
        %v428 = vld [vmem:[%s223 + $0x488] sm:$0xff]
        %v429 = vld [vmem:[%s223 + $0x490] sm:$0xff]
        %v430 = vld [vmem:[%s223 + $0x498] sm:$0xff]
        %v431 = vld [vmem:[%s223 + $0x4a0] sm:$0xff]
        %v432 = vld [vmem:[%s223 + $0x4a8] sm:$0xff]
        %v433 = vld [vmem:[%s223 + $0x4b0] sm:$0xff]
        %v434 = vld [vmem:[%s223 + $0x4b8] sm:$0xff]
        %v435 = vld [vmem:[%s223 + $0x4c0] sm:$0xff]
        %v436 = vld [vmem:[%s223 + $0x4c8] sm:$0xff]
        %v437 = vld [vmem:[%s223 + $0x4d0] sm:$0xff]
        %v438 = vld [vmem:[%s223 + $0x4d8] sm:$0xff]
        %v439 = vld [vmem:[%s223 + $0x4e0] sm:$0xff]
        %v440 = vld [vmem:[%s223 + $0x4e8] sm:$0xff]
        %v441 = vld [vmem:[%s223 + $0x4f0] sm:$0xff]
        %v442 = vld [vmem:[%s223 + $0x4f8] sm:$0xff]
        %v443 = vld [vmem:[%s223 + $0x500] sm:$0xff]
        %v444 = vld [vmem:[%s223 + $0x508] sm:$0xff]
        %v445 = vld [vmem:[%s223 + $0x510] sm:$0xff]
        %v446 = vld [vmem:[%s223 + $0x518] sm:$0xff]
        %v447 = vld [vmem:[%s223 + $0x520] sm:$0xff]
        %v448 = vld [vmem:[%s223 + $0x528] sm:$0xff]
        %v449 = vld [vmem:[%s223 + $0x530] sm:$0xff]
        %v450 = vld [vmem:[%s223 + $0x538] sm:$0xff]
        %v451 = vld [vmem:[%s223 + $0x540] sm:$0xff]
        %v452 = vld [vmem:[%s223 + $0x548] sm:$0xff]
        %v453 = vld [vmem:[%s223 + $0x550] sm:$0xff]
        %v454 = vld [vmem:[%s223 + $0x558] sm:$0xff]
        %v455 = vld [vmem:[%s223 + $0x560] sm:$0xff]
        %v456 = vld [vmem:[%s223 + $0x568] sm:$0xff]
        %v457 = vld [vmem:[%s223 + $0x570] sm:$0xff]
        %v458 = vld [vmem:[%s223 + $0x578] sm:$0xff]
        %v459 = vld [vmem:[%s223 + $0x580] sm:$0xff]
        %v460 = vld [vmem:[%s223 + $0x588] sm:$0xff]
        %v461 = vld [vmem:[%s223 + $0x590] sm:$0xff]
        %v462 = vld [vmem:[%s223 + $0x598] sm:$0xff]
        %v463 = vld [vmem:[%s223 + $0x5a0] sm:$0xff]
        %v464 = vld [vmem:[%s223 + $0x5a8] sm:$0xff]
        %v465 = vld [vmem:[%s223 + $0x5b0] sm:$0xff]
        %v466 = vld [vmem:[%s223 + $0x5b8] sm:$0xff]
        %v467 = vld [vmem:[%s223 + $0x5c0] sm:$0xff]
        %v468 = vld [vmem:[%s223 + $0x5c8] sm:$0xff]
        %v469 = vld [vmem:[%s223 + $0x5d0] sm:$0xff]
        %v470 = vld [vmem:[%s223 + $0x5d8] sm:$0xff]
        %v471 = vld [vmem:[%s223 + $0x5e0] sm:$0xff]
        %v472 = vld [vmem:[%s223 + $0x5e8] sm:$0xff]
        %v473 = vld [vmem:[%s223 + $0x5f0] sm:$0xff]
        %v474 = vld [vmem:[%s223 + $0x5f8] sm:$0xff]
        %v475 = vld [vmem:[%s223 + $0x600] sm:$0xff]
        %v476 = vld [vmem:[%s223 + $0x608] sm:$0xff]
        %v477 = vld [vmem:[%s223 + $0x610] sm:$0xff]
        %v478 = vld [vmem:[%s223 + $0x618] sm:$0xff]
        %v479 = vld [vmem:[%s223 + $0x620] sm:$0xff]
        %v480 = vld [vmem:[%s223 + $0x628] sm:$0xff]
        %v481 = vld [vmem:[%s223 + $0x630] sm:$0xff]
        %v482 = vld [vmem:[%s223 + $0x638] sm:$0xff]
        %v483 = vld [vmem:[%s223 + $0x640] sm:$0xff]
        %v484 = vld [vmem:[%s223 + $0x648] sm:$0xff]
        %v485 = vld [vmem:[%s223 + $0x650] sm:$0xff]
        %v486 = vld [vmem:[%s223 + $0x658] sm:$0xff]
        %v487 = vld [vmem:[%s223 + $0x660] sm:$0xff]
        %v488 = vld [vmem:[%s223 + $0x668] sm:$0xff]
        %v489 = vld [vmem:[%s223 + $0x670] sm:$0xff]
        %v490 = vld [vmem:[%s223 + $0x678] sm:$0xff]
        %v491 = vld [vmem:[%s223 + $0x680] sm:$0xff]
        %v492 = vld [vmem:[%s223 + $0x688] sm:$0xff]
        %v493 = vld [vmem:[%s223 + $0x690] sm:$0xff]
        %v494 = vld [vmem:[%s223 + $0x698] sm:$0xff]
        %v495 = vld [vmem:[%s223 + $0x6a0] sm:$0xff]
        %v496 = vld [vmem:[%s223 + $0x6a8] sm:$0xff]
        %v497 = vld [vmem:[%s223 + $0x6b0] sm:$0xff]
        %v498 = vld [vmem:[%s223 + $0x6b8] sm:$0xff]
        %v499 = vld [vmem:[%s223 + $0x6c0] sm:$0xff]
        %v500 = vld [vmem:[%s223 + $0x6c8] sm:$0xff]
        %v501 = vld [vmem:[%s223 + $0x6d0] sm:$0xff]
        %v502 = vld [vmem:[%s223 + $0x6d8] sm:$0xff]
        %v503 = vld [vmem:[%s223 + $0x6e0] sm:$0xff]
        %v504 = vld [vmem:[%s223 + $0x6e8] sm:$0xff]
        %v505 = vld [vmem:[%s223 + $0x6f0] sm:$0xff]
        %v506 = vld [vmem:[%s223 + $0x6f8] sm:$0xff]
        %v507 = vld [vmem:[%s223 + $0x700] sm:$0xff]
        %v508 = vld [vmem:[%s223 + $0x708] sm:$0xff]
        %v509 = vld [vmem:[%s223 + $0x710] sm:$0xff]
        %v510 = vld [vmem:[%s223 + $0x718] sm:$0xff]
        %v511 = vld [vmem:[%s223 + $0x720] sm:$0xff]
        %v512 = vld [vmem:[%s223 + $0x728] sm:$0xff]
        %v513 = vld [vmem:[%s223 + $0x730] sm:$0xff]
        %v514 = vld [vmem:[%s223 + $0x738] sm:$0xff]
        %v515 = vld [vmem:[%s223 + $0x740] sm:$0xff]
        %v516 = vld [vmem:[%s223 + $0x748] sm:$0xff]
        %v517 = vld [vmem:[%s223 + $0x750] sm:$0xff]
        %v518 = vld [vmem:[%s223 + $0x758] sm:$0xff]
        %v519 = vld [vmem:[%s223 + $0x760] sm:$0xff]
        %v520 = vld [vmem:[%s223 + $0x768] sm:$0xff]
        %v521 = vld [vmem:[%s223 + $0x770] sm:$0xff]
        %v522 = vld [vmem:[%s223 + $0x778] sm:$0xff]
        %v523 = vld [vmem:[%s223 + $0x780] sm:$0xff]
        %v524 = vld [vmem:[%s223 + $0x788] sm:$0xff]
        %v525 = vld [vmem:[%s223 + $0x790] sm:$0xff]
        %v526 = vld [vmem:[%s223 + $0x798] sm:$0xff]
        %v527 = vld [vmem:[%s223 + $0x7a0] sm:$0xff]
        %v528 = vld [vmem:[%s223 + $0x7a8] sm:$0xff]
        %v529 = vld [vmem:[%s223 + $0x7b0] sm:$0xff]
        %v530 = vld [vmem:[%s223 + $0x7b8] sm:$0xff]
        %v531 = vld [vmem:[%s223 + $0x7c0] sm:$0xff]
        %v532 = vld [vmem:[%s223 + $0x7c8] sm:$0xff]
        %v533 = vld [vmem:[%s223 + $0x7d0] sm:$0xff]
        %v534 = vld [vmem:[%s223 + $0x7d8] sm:$0xff]
        %v535 = vld [vmem:[%s223 + $0x7e0] sm:$0xff]
        %v536 = vld [vmem:[%s223 + $0x7e8] sm:$0xff]
        %v537 = vld [vmem:[%s223 + $0x7f0] sm:$0xff]
        %v538 = vld [vmem:[%s223 + $0x7f8] sm:$0xff]
        %v539 = vld [vmem:[%s223 + $0x800] sm:$0xff]
        %v540 = vld [vmem:[%s223 + $0x808] sm:$0xff]
        %v541 = vld [vmem:[%s223 + $0x810] sm:$0xff]
        %v542 = vld [vmem:[%s223 + $0x818] sm:$0xff]
        %v543 = vld [vmem:[%s223 + $0x820] sm:$0xff]
        %v544 = vld [vmem:[%s223 + $0x828] sm:$0xff]
        %v545 = vld [vmem:[%s223 + $0x830] sm:$0xff]
        %v546 = vld [vmem:[%s223 + $0x838] sm:$0xff]
        %v547 = vld [vmem:[%s223 + $0x840] sm:$0xff]
        %v548 = vld [vmem:[%s223 + $0x848] sm:$0xff]
        %v549 = vld [vmem:[%s223 + $0x850] sm:$0xff]
        %v550 = vld [vmem:[%s223 + $0x858] sm:$0xff]
        %v551 = vld [vmem:[%s223 + $0x860] sm:$0xff]
        %v552 = vld [vmem:[%s223 + $0x868] sm:$0xff]
        %v553 = vld [vmem:[%s223 + $0x870] sm:$0xff]
        %v554 = vld [vmem:[%s223 + $0x878] sm:$0xff]
        %v555 = vld [vmem:[%s223 + $0x880] sm:$0xff]
        %v556 = vld [vmem:[%s223 + $0x888] sm:$0xff]
        %v557 = vld [vmem:[%s223 + $0x890] sm:$0xff]
        %v558 = vld [vmem:[%s223 + $0x898] sm:$0xff]
        %v559 = vld [vmem:[%s223 + $0x8a0] sm:$0xff]
        %v560 = vld [vmem:[%s223 + $0x8a8] sm:$0xff]
        %v561 = vld [vmem:[%s223 + $0x8b0] sm:$0xff]
        %v562 = vld [vmem:[%s223 + $0x8b8] sm:$0xff]
        %v563 = vld [vmem:[%s223 + $0x8c0] sm:$0xff]
        %v564 = vld [vmem:[%s223 + $0x8c8] sm:$0xff]
        %v565 = vld [vmem:[%s223 + $0x8d0] sm:$0xff]
        %v566 = vld [vmem:[%s223 + $0x8d8] sm:$0xff]
        %v567 = vld [vmem:[%s223 + $0x8e0] sm:$0xff]
        %v568 = vld [vmem:[%s223 + $0x8e8] sm:$0xff]
        %v569 = vld [vmem:[%s223 + $0x8f0] sm:$0xff]
        %v570 = vld [vmem:[%s223 + $0x8f8] sm:$0xff]
        %v571 = vld [vmem:[%s223 + $0x900] sm:$0xff]
        %v572 = vld [vmem:[%s223 + $0x908] sm:$0xff]
        %v573 = vld [vmem:[%s223 + $0x910] sm:$0xff]
        %v574 = vld [vmem:[%s223 + $0x918] sm:$0xff]
        %v575 = vld [vmem:[%s223 + $0x920] sm:$0xff]
        %v576 = vld [vmem:[%s223 + $0x928] sm:$0xff]
        %v577 = vld [vmem:[%s223 + $0x930] sm:$0xff]
        %v578 = vld [vmem:[%s223 + $0x938] sm:$0xff]
        %v579 = vld [vmem:[%s223 + $0x940] sm:$0xff]
        %v580 = vld [vmem:[%s223 + $0x948] sm:$0xff]
        %v581 = vld [vmem:[%s223 + $0x950] sm:$0xff]
        %v582 = vld [vmem:[%s223 + $0x958] sm:$0xff]
        %v583 = vld [vmem:[%s223 + $0x960] sm:$0xff]
        %v584 = vld [vmem:[%s223 + $0x968] sm:$0xff]
        %v585 = vld [vmem:[%s223 + $0x970] sm:$0xff]
        %v586 = vld [vmem:[%s223 + $0x978] sm:$0xff]
        %v587 = vld [vmem:[%s223 + $0x980] sm:$0xff]
        %v588 = vld [vmem:[%s223 + $0x988] sm:$0xff]
        %v589 = vld [vmem:[%s223 + $0x990] sm:$0xff]
        %v590 = vld [vmem:[%s223 + $0x998] sm:$0xff]
        %v591 = vld [vmem:[%s223 + $0x9a0] sm:$0xff]
        %v592 = vld [vmem:[%s223 + $0x9a8] sm:$0xff]
        %v593 = vld [vmem:[%s223 + $0x9b0] sm:$0xff]
        %v594 = vld [vmem:[%s223 + $0x9b8] sm:$0xff]
        %v595 = vld [vmem:[%s223 + $0x9c0] sm:$0xff]
        %v596 = vld [vmem:[%s223 + $0x9c8] sm:$0xff]
        %v597 = vld [vmem:[%s223 + $0x9d0] sm:$0xff]
        %v598 = vld [vmem:[%s223 + $0x9d8] sm:$0xff]
        %v599 = vld [vmem:[%s223 + $0x9e0] sm:$0xff]
        %v600 = vld [vmem:[%s223 + $0x9e8] sm:$0xff]
        %v601 = vld [vmem:[%s223 + $0x9f0] sm:$0xff]
        %v602 = vld [vmem:[%s223 + $0x9f8] sm:$0xff]
        %v603 = vld [vmem:[%s223 + $0xa00] sm:$0xff]
        %v604 = vld [vmem:[%s223 + $0xa08] sm:$0xff]
        %v605 = vld [vmem:[%s223 + $0xa10] sm:$0xff]
        %v606 = vld [vmem:[%s223 + $0xa18] sm:$0xff]
        %v607 = vld [vmem:[%s223 + $0xa20] sm:$0xff]
        %v608 = vld [vmem:[%s223 + $0xa28] sm:$0xff]
        %v609 = vld [vmem:[%s223 + $0xa30] sm:$0xff]
        %v610 = vld [vmem:[%s223 + $0xa38] sm:$0xff]
        %v611 = vld [vmem:[%s223 + $0xa40] sm:$0xff]
        %v612 = vld [vmem:[%s223 + $0xa48] sm:$0xff]
        %v613 = vld [vmem:[%s223 + $0xa50] sm:$0xff]
        %v614 = vld [vmem:[%s223 + $0xa58] sm:$0xff]
        %v615 = vld [vmem:[%s223 + $0xa60] sm:$0xff]
        %v616 = vld [vmem:[%s223 + $0xa68] sm:$0xff]
        %v617 = vld [vmem:[%s223 + $0xa70] sm:$0xff]
        %v618 = vld [vmem:[%s223 + $0xa78] sm:$0xff]
        %v619 = vld [vmem:[%s223 + $0xa80] sm:$0xff]
        %v620 = vld [vmem:[%s223 + $0xa88] sm:$0xff]
        %v621 = vld [vmem:[%s223 + $0xa90] sm:$0xff]
        %v622 = vld [vmem:[%s223 + $0xa98] sm:$0xff]
        %v623 = vld [vmem:[%s223 + $0xaa0] sm:$0xff]
        %v624 = vld [vmem:[%s223 + $0xaa8] sm:$0xff]
        %v625 = vld [vmem:[%s223 + $0xab0] sm:$0xff]
        %v626 = vld [vmem:[%s223 + $0xab8] sm:$0xff]
        %v627 = vld [vmem:[%s223 + $0xac0] sm:$0xff]
        %v628 = vld [vmem:[%s223 + $0xac8] sm:$0xff]
        %v629 = vld [vmem:[%s223 + $0xad0] sm:$0xff]
        %v630 = vld [vmem:[%s223 + $0xad8] sm:$0xff]
        %v631 = vld [vmem:[%s223 + $0xae0] sm:$0xff]
        %v632 = vld [vmem:[%s223 + $0xae8] sm:$0xff]
        %v633 = vld [vmem:[%s223 + $0xaf0] sm:$0xff]
        %v634 = vld [vmem:[%s223 + $0xaf8] sm:$0xff]
        %v635 = vld [vmem:[%s223 + $0xb00] sm:$0xff]
        %v636 = vld [vmem:[%s223 + $0xb08] sm:$0xff]
        %v637 = vld [vmem:[%s223 + $0xb10] sm:$0xff]
        %v638 = vld [vmem:[%s223 + $0xb18] sm:$0xff]
        %v639 = vld [vmem:[%s223 + $0xb20] sm:$0xff]
        %v640 = vld [vmem:[%s223 + $0xb28] sm:$0xff]
        %v641 = vld [vmem:[%s223 + $0xb30] sm:$0xff]
        %v642 = vld [vmem:[%s223 + $0xb38] sm:$0xff]
        %v643 = vld [vmem:[%s223 + $0xb40] sm:$0xff]
        %v644 = vld [vmem:[%s223 + $0xb48] sm:$0xff]
        %v645 = vld [vmem:[%s223 + $0xb50] sm:$0xff]
        %v646 = vld [vmem:[%s223 + $0xb58] sm:$0xff]
        %v647 = vld [vmem:[%s223 + $0xb60] sm:$0xff]
        %v648 = vld [vmem:[%s223 + $0xb68] sm:$0xff]
        %v649 = vld [vmem:[%s223 + $0xb70] sm:$0xff]
        %v650 = vld [vmem:[%s223 + $0xb78] sm:$0xff]
        %v651 = vld [vmem:[%s223 + $0xb80] sm:$0xff]
        %v652 = vld [vmem:[%s223 + $0xb88] sm:$0xff]
        %v653 = vld [vmem:[%s223 + $0xb90] sm:$0xff]
        %v654 = vld [vmem:[%s223 + $0xb98] sm:$0xff]
        %v655 = vld [vmem:[%s223 + $0xba0] sm:$0xff]
        %v656 = vld [vmem:[%s223 + $0xba8] sm:$0xff]
        %v657 = vld [vmem:[%s223 + $0xbb0] sm:$0xff]
        %v658 = vld [vmem:[%s223 + $0xbb8] sm:$0xff]
        %v659 = vld [vmem:[%s223 + $0xbc0] sm:$0xff]
        %v660 = vld [vmem:[%s223 + $0xbc8] sm:$0xff]
        %v661 = vld [vmem:[%s223 + $0xbd0] sm:$0xff]
        %v662 = vld [vmem:[%s223 + $0xbd8] sm:$0xff]
        %v663 = vld [vmem:[%s223 + $0xbe0] sm:$0xff]
        %v664 = vld [vmem:[%s223 + $0xbe8] sm:$0xff]
        %v665 = vld [vmem:[%s223 + $0xbf0] sm:$0xff]
        %v666 = vld [vmem:[%s223 + $0xbf8] sm:$0xff]
        %v671 = vunpack.c.l.b16 %v273
        %v672 = vunpack.c.h.b16 %v273
        %v673 = vunpack.c.l.b16 %v274
        %v674 = vunpack.c.h.b16 %v274
        %v675 = vunpack.c.l.b16 %v275
        %v676 = vunpack.c.h.b16 %v275
        %v677 = vunpack.c.l.b16 %v276
        %v678 = vunpack.c.h.b16 %v276
        %v679 = vpack.c.b16 %v671, %v671
        %v680 = vpack.c.b16 %v672, %v672
        %v681 = vpack.c.b16 %v673, %v673
        %v682 = vpack.c.b16 %v674, %v674
        %v683 = vpack.c.b16 %v675, %v675
        %v684 = vpack.c.b16 %v676, %v676
        %v685 = vpack.c.b16 %v677, %v677
        %v686 = vpack.c.b16 %v678, %v678
        %v1079 = vunpack.c.l.b16 %v283
        %v1080 = vunpack.c.h.b16 %v283
        %v1081 = vunpack.c.l.b16 %v284
        %v1082 = vunpack.c.h.b16 %v284
        %v1083 = vunpack.c.l.b16 %v285
        %v1084 = vunpack.c.h.b16 %v285
        %v1085 = vunpack.c.l.b16 %v286
        %v1086 = vunpack.c.h.b16 %v286
        %v1087 = vunpack.c.l.b16 %v287
        %v1088 = vunpack.c.h.b16 %v287
        %v1089 = vunpack.c.l.b16 %v288
        %v1090 = vunpack.c.h.b16 %v288
        %v1091 = vunpack.c.l.b16 %v289
        %v1092 = vunpack.c.h.b16 %v289
        %v1093 = vunpack.c.l.b16 %v290
        %v1094 = vunpack.c.h.b16 %v290
        %v1095 = vunpack.c.l.b16 %v291
        %v1096 = vunpack.c.h.b16 %v291
        %v1097 = vunpack.c.l.b16 %v292
        %v1098 = vunpack.c.h.b16 %v292
        %v1099 = vunpack.c.l.b16 %v293
        %v1100 = vunpack.c.h.b16 %v293
        %v1101 = vunpack.c.l.b16 %v294
        %v1102 = vunpack.c.h.b16 %v294
        %v1103 = vunpack.c.l.b16 %v295
        %v1104 = vunpack.c.h.b16 %v295
        %v1105 = vunpack.c.l.b16 %v296
        %v1106 = vunpack.c.h.b16 %v296
        %v1107 = vunpack.c.l.b16 %v297
        %v1108 = vunpack.c.h.b16 %v297
        %v1109 = vunpack.c.l.b16 %v298
        %v1110 = vunpack.c.h.b16 %v298
        %v1111 = vunpack.c.l.b16 %v299
        %v1112 = vunpack.c.h.b16 %v299
        %v1113 = vunpack.c.l.b16 %v300
        %v1114 = vunpack.c.h.b16 %v300
        %v1115 = vunpack.c.l.b16 %v301
        %v1116 = vunpack.c.h.b16 %v301
        %v1117 = vunpack.c.l.b16 %v302
        %v1118 = vunpack.c.h.b16 %v302
        %v1119 = vunpack.c.l.b16 %v303
        %v1120 = vunpack.c.h.b16 %v303
        %v1121 = vunpack.c.l.b16 %v304
        %v1122 = vunpack.c.h.b16 %v304
        %v1123 = vunpack.c.l.b16 %v305
        %v1124 = vunpack.c.h.b16 %v305
        %v1125 = vunpack.c.l.b16 %v306
        %v1126 = vunpack.c.h.b16 %v306
        %v1127 = vunpack.c.l.b16 %v307
        %v1128 = vunpack.c.h.b16 %v307
        %v1129 = vunpack.c.l.b16 %v308
        %v1130 = vunpack.c.h.b16 %v308
        %v1131 = vunpack.c.l.b16 %v309
        %v1132 = vunpack.c.h.b16 %v309
        %v1133 = vunpack.c.l.b16 %v310
        %v1134 = vunpack.c.h.b16 %v310
        %v1135 = vunpack.c.l.b16 %v311
        %v1136 = vunpack.c.h.b16 %v311
        %v1137 = vunpack.c.l.b16 %v312
        %v1138 = vunpack.c.h.b16 %v312
        %v1139 = vunpack.c.l.b16 %v313
        %v1140 = vunpack.c.h.b16 %v313
        %v1141 = vunpack.c.l.b16 %v314
        %v1142 = vunpack.c.h.b16 %v314
        %v1143 = vunpack.c.l.b16 %v315
        %v1144 = vunpack.c.h.b16 %v315
        %v1145 = vunpack.c.l.b16 %v316
        %v1146 = vunpack.c.h.b16 %v316
        %v1147 = vunpack.c.l.b16 %v317
        %v1148 = vunpack.c.h.b16 %v317
        %v1149 = vunpack.c.l.b16 %v318
        %v1150 = vunpack.c.h.b16 %v318
        %v1151 = vunpack.c.l.b16 %v319
        %v1152 = vunpack.c.h.b16 %v319
        %v1153 = vunpack.c.l.b16 %v320
        %v1154 = vunpack.c.h.b16 %v320
        %v1155 = vunpack.c.l.b16 %v321
        %v1156 = vunpack.c.h.b16 %v321
        %v1157 = vunpack.c.l.b16 %v322
        %v1158 = vunpack.c.h.b16 %v322
        %v1159 = vunpack.c.l.b16 %v323
        %v1160 = vunpack.c.h.b16 %v323
        %v1161 = vunpack.c.l.b16 %v324
        %v1162 = vunpack.c.h.b16 %v324
        %v1163 = vunpack.c.l.b16 %v325
        %v1164 = vunpack.c.h.b16 %v325
        %v1165 = vunpack.c.l.b16 %v326
        %v1166 = vunpack.c.h.b16 %v326
        %v1167 = vunpack.c.l.b16 %v327
        %v1168 = vunpack.c.h.b16 %v327
        %v1169 = vunpack.c.l.b16 %v328
        %v1170 = vunpack.c.h.b16 %v328
        %v1171 = vunpack.c.l.b16 %v329
        %v1172 = vunpack.c.h.b16 %v329
        %v1173 = vunpack.c.l.b16 %v330
        %v1174 = vunpack.c.h.b16 %v330
        %v1175 = vunpack.c.l.b16 %v331
        %v1176 = vunpack.c.h.b16 %v331
        %v1177 = vunpack.c.l.b16 %v332
        %v1178 = vunpack.c.h.b16 %v332
        %v1179 = vunpack.c.l.b16 %v333
        %v1180 = vunpack.c.h.b16 %v333
        %v1181 = vunpack.c.l.b16 %v334
        %v1182 = vunpack.c.h.b16 %v334
        %v1183 = vunpack.c.l.b16 %v335
        %v1184 = vunpack.c.h.b16 %v335
        %v1185 = vunpack.c.l.b16 %v336
        %v1186 = vunpack.c.h.b16 %v336
        %v1187 = vunpack.c.l.b16 %v337
        %v1188 = vunpack.c.h.b16 %v337
        %v1189 = vunpack.c.l.b16 %v338
        %v1190 = vunpack.c.h.b16 %v338
        %v1191 = vunpack.c.l.b16 %v339
        %v1192 = vunpack.c.h.b16 %v339
        %v1193 = vunpack.c.l.b16 %v340
        %v1194 = vunpack.c.h.b16 %v340
        %v1195 = vunpack.c.l.b16 %v341
        %v1196 = vunpack.c.h.b16 %v341
        %v1197 = vunpack.c.l.b16 %v342
        %v1198 = vunpack.c.h.b16 %v342
        %v1199 = vunpack.c.l.b16 %v343
        %v1200 = vunpack.c.h.b16 %v343
        %v1201 = vunpack.c.l.b16 %v344
        %v1202 = vunpack.c.h.b16 %v344
        %v1203 = vunpack.c.l.b16 %v345
        %v1204 = vunpack.c.h.b16 %v345
        %v1205 = vunpack.c.l.b16 %v346
        %v1206 = vunpack.c.h.b16 %v346
        %v1207 = vunpack.c.l.b16 %v347
        %v1208 = vunpack.c.h.b16 %v347
        %v1209 = vunpack.c.l.b16 %v348
        %v1210 = vunpack.c.h.b16 %v348
        %v1211 = vunpack.c.l.b16 %v349
        %v1212 = vunpack.c.h.b16 %v349
        %v1213 = vunpack.c.l.b16 %v350
        %v1214 = vunpack.c.h.b16 %v350
        %v1215 = vunpack.c.l.b16 %v351
        %v1216 = vunpack.c.h.b16 %v351
        %v1217 = vunpack.c.l.b16 %v352
        %v1218 = vunpack.c.h.b16 %v352
        %v1219 = vunpack.c.l.b16 %v353
        %v1220 = vunpack.c.h.b16 %v353
        %v1221 = vunpack.c.l.b16 %v354
        %v1222 = vunpack.c.h.b16 %v354
        %v1223 = vunpack.c.l.b16 %v355
        %v1224 = vunpack.c.h.b16 %v355
        %v1225 = vunpack.c.l.b16 %v356
        %v1226 = vunpack.c.h.b16 %v356
        %v1227 = vunpack.c.l.b16 %v357
        %v1228 = vunpack.c.h.b16 %v357
        %v1229 = vunpack.c.l.b16 %v358
        %v1230 = vunpack.c.h.b16 %v358
        %v1231 = vunpack.c.l.b16 %v359
        %v1232 = vunpack.c.h.b16 %v359
        %v1233 = vunpack.c.l.b16 %v360
        %v1234 = vunpack.c.h.b16 %v360
        %v1235 = vunpack.c.l.b16 %v361
        %v1236 = vunpack.c.h.b16 %v361
        %v1237 = vunpack.c.l.b16 %v362
        %v1238 = vunpack.c.h.b16 %v362
        %v1239 = vunpack.c.l.b16 %v363
        %v1240 = vunpack.c.h.b16 %v363
        %v1241 = vunpack.c.l.b16 %v364
        %v1242 = vunpack.c.h.b16 %v364
        %v1243 = vunpack.c.l.b16 %v365
        %v1244 = vunpack.c.h.b16 %v365
        %v1245 = vunpack.c.l.b16 %v366
        %v1246 = vunpack.c.h.b16 %v366
        %v1247 = vunpack.c.l.b16 %v367
        %v1248 = vunpack.c.h.b16 %v367
        %v1249 = vunpack.c.l.b16 %v368
        %v1250 = vunpack.c.h.b16 %v368
        %v1251 = vunpack.c.l.b16 %v369
        %v1252 = vunpack.c.h.b16 %v369
        %v1253 = vunpack.c.l.b16 %v370
        %v1254 = vunpack.c.h.b16 %v370
        %v1255 = vunpack.c.l.b16 %v371
        %v1256 = vunpack.c.h.b16 %v371
        %v1257 = vunpack.c.l.b16 %v372
        %v1258 = vunpack.c.h.b16 %v372
        %v1259 = vunpack.c.l.b16 %v373
        %v1260 = vunpack.c.h.b16 %v373
        %v1261 = vunpack.c.l.b16 %v374
        %v1262 = vunpack.c.h.b16 %v374
        %v1263 = vunpack.c.l.b16 %v375
        %v1264 = vunpack.c.h.b16 %v375
        %v1265 = vunpack.c.l.b16 %v376
        %v1266 = vunpack.c.h.b16 %v376
        %v1267 = vunpack.c.l.b16 %v377
        %v1268 = vunpack.c.h.b16 %v377
        %v1269 = vunpack.c.l.b16 %v378
        %v1270 = vunpack.c.h.b16 %v378
        %v1271 = vunpack.c.l.b16 %v379
        %v1272 = vunpack.c.h.b16 %v379
        %v1273 = vunpack.c.l.b16 %v380
        %v1274 = vunpack.c.h.b16 %v380
        %v1275 = vunpack.c.l.b16 %v381
        %v1276 = vunpack.c.h.b16 %v381
        %v1277 = vunpack.c.l.b16 %v382
        %v1278 = vunpack.c.h.b16 %v382
        %v1279 = vunpack.c.l.b16 %v383
        %v1280 = vunpack.c.h.b16 %v383
        %v1281 = vunpack.c.l.b16 %v384
        %v1282 = vunpack.c.h.b16 %v384
        %v1283 = vunpack.c.l.b16 %v385
        %v1284 = vunpack.c.h.b16 %v385
        %v1285 = vunpack.c.l.b16 %v386
        %v1286 = vunpack.c.h.b16 %v386
        %v1287 = vunpack.c.l.b16 %v387
        %v1288 = vunpack.c.h.b16 %v387
        %v1289 = vunpack.c.l.b16 %v388
        %v1290 = vunpack.c.h.b16 %v388
        %v1291 = vunpack.c.l.b16 %v389
        %v1292 = vunpack.c.h.b16 %v389
        %v1293 = vunpack.c.l.b16 %v390
        %v1294 = vunpack.c.h.b16 %v390
        %v1295 = vunpack.c.l.b16 %v391
        %v1296 = vunpack.c.h.b16 %v391
        %v1297 = vunpack.c.l.b16 %v392
        %v1298 = vunpack.c.h.b16 %v392
        %v1299 = vunpack.c.l.b16 %v393
        %v1300 = vunpack.c.h.b16 %v393
        %v1301 = vunpack.c.l.b16 %v394
        %v1302 = vunpack.c.h.b16 %v394
        %v1303 = vunpack.c.l.b16 %v395
        %v1304 = vunpack.c.h.b16 %v395
        %v1305 = vunpack.c.l.b16 %v396
        %v1306 = vunpack.c.h.b16 %v396
        %v1307 = vunpack.c.l.b16 %v397
        %v1308 = vunpack.c.h.b16 %v397
        %v1309 = vunpack.c.l.b16 %v398
        %v1310 = vunpack.c.h.b16 %v398
        %v1311 = vunpack.c.l.b16 %v399
        %v1312 = vunpack.c.h.b16 %v399
        %v1313 = vunpack.c.l.b16 %v400
        %v1314 = vunpack.c.h.b16 %v400
        %v1315 = vunpack.c.l.b16 %v401
        %v1316 = vunpack.c.h.b16 %v401
        %v1317 = vunpack.c.l.b16 %v402
        %v1318 = vunpack.c.h.b16 %v402
        %v1319 = vunpack.c.l.b16 %v403
        %v1320 = vunpack.c.h.b16 %v403
        %v1321 = vunpack.c.l.b16 %v404
        %v1322 = vunpack.c.h.b16 %v404
        %v1323 = vunpack.c.l.b16 %v405
        %v1324 = vunpack.c.h.b16 %v405
        %v1325 = vunpack.c.l.b16 %v406
        %v1326 = vunpack.c.h.b16 %v406
        %v1327 = vunpack.c.l.b16 %v407
        %v1328 = vunpack.c.h.b16 %v407
        %v1329 = vunpack.c.l.b16 %v408
        %v1330 = vunpack.c.h.b16 %v408
        %v1331 = vunpack.c.l.b16 %v409
        %v1332 = vunpack.c.h.b16 %v409
        %v1333 = vunpack.c.l.b16 %v410
        %v1334 = vunpack.c.h.b16 %v410
        %v1335 = vunpack.c.l.b16 %v411
        %v1336 = vunpack.c.h.b16 %v411
        %v1337 = vunpack.c.l.b16 %v412
        %v1338 = vunpack.c.h.b16 %v412
        %v1339 = vunpack.c.l.b16 %v413
        %v1340 = vunpack.c.h.b16 %v413
        %v1341 = vunpack.c.l.b16 %v414
        %v1342 = vunpack.c.h.b16 %v414
        %v1343 = vunpack.c.l.b16 %v415
        %v1344 = vunpack.c.h.b16 %v415
        %v1345 = vunpack.c.l.b16 %v416
        %v1346 = vunpack.c.h.b16 %v416
        %v1347 = vunpack.c.l.b16 %v417
        %v1348 = vunpack.c.h.b16 %v417
        %v1349 = vunpack.c.l.b16 %v418
        %v1350 = vunpack.c.h.b16 %v418
        %v1351 = vunpack.c.l.b16 %v419
        %v1352 = vunpack.c.h.b16 %v419
        %v1353 = vunpack.c.l.b16 %v420
        %v1354 = vunpack.c.h.b16 %v420
        %v1355 = vunpack.c.l.b16 %v421
        %v1356 = vunpack.c.h.b16 %v421
        %v1357 = vunpack.c.l.b16 %v422
        %v1358 = vunpack.c.h.b16 %v422
        %v1359 = vunpack.c.l.b16 %v423
        %v1360 = vunpack.c.h.b16 %v423
        %v1361 = vunpack.c.l.b16 %v424
        %v1362 = vunpack.c.h.b16 %v424
        %v1363 = vunpack.c.l.b16 %v425
        %v1364 = vunpack.c.h.b16 %v425
        %v1365 = vunpack.c.l.b16 %v426
        %v1366 = vunpack.c.h.b16 %v426
        %v1367 = vunpack.c.l.b16 %v427
        %v1368 = vunpack.c.h.b16 %v427
        %v1369 = vunpack.c.l.b16 %v428
        %v1370 = vunpack.c.h.b16 %v428
        %v1371 = vunpack.c.l.b16 %v429
        %v1372 = vunpack.c.h.b16 %v429
        %v1373 = vunpack.c.l.b16 %v430
        %v1374 = vunpack.c.h.b16 %v430
        %v1375 = vunpack.c.l.b16 %v431
        %v1376 = vunpack.c.h.b16 %v431
        %v1377 = vunpack.c.l.b16 %v432
        %v1378 = vunpack.c.h.b16 %v432
        %v1379 = vunpack.c.l.b16 %v433
        %v1380 = vunpack.c.h.b16 %v433
        %v1381 = vunpack.c.l.b16 %v434
        %v1382 = vunpack.c.h.b16 %v434
        %v1383 = vunpack.c.l.b16 %v435
        %v1384 = vunpack.c.h.b16 %v435
        %v1385 = vunpack.c.l.b16 %v436
        %v1386 = vunpack.c.h.b16 %v436
        %v1387 = vunpack.c.l.b16 %v437
        %v1388 = vunpack.c.h.b16 %v437
        %v1389 = vunpack.c.l.b16 %v438
        %v1390 = vunpack.c.h.b16 %v438
        %v1391 = vunpack.c.l.b16 %v439
        %v1392 = vunpack.c.h.b16 %v439
        %v1393 = vunpack.c.l.b16 %v440
        %v1394 = vunpack.c.h.b16 %v440
        %v1395 = vunpack.c.l.b16 %v441
        %v1396 = vunpack.c.h.b16 %v441
        %v1397 = vunpack.c.l.b16 %v442
        %v1398 = vunpack.c.h.b16 %v442
        %v1399 = vunpack.c.l.b16 %v443
        %v1400 = vunpack.c.h.b16 %v443
        %v1401 = vunpack.c.l.b16 %v444
        %v1402 = vunpack.c.h.b16 %v444
        %v1403 = vunpack.c.l.b16 %v445
        %v1404 = vunpack.c.h.b16 %v445
        %v1405 = vunpack.c.l.b16 %v446
        %v1406 = vunpack.c.h.b16 %v446
        %v1407 = vunpack.c.l.b16 %v447
        %v1408 = vunpack.c.h.b16 %v447
        %v1409 = vunpack.c.l.b16 %v448
        %v1410 = vunpack.c.h.b16 %v448
        %v1411 = vunpack.c.l.b16 %v449
        %v1412 = vunpack.c.h.b16 %v449
        %v1413 = vunpack.c.l.b16 %v450
        %v1414 = vunpack.c.h.b16 %v450
        %v1415 = vunpack.c.l.b16 %v451
        %v1416 = vunpack.c.h.b16 %v451
        %v1417 = vunpack.c.l.b16 %v452
        %v1418 = vunpack.c.h.b16 %v452
        %v1419 = vunpack.c.l.b16 %v453
        %v1420 = vunpack.c.h.b16 %v453
        %v1421 = vunpack.c.l.b16 %v454
        %v1422 = vunpack.c.h.b16 %v454
        %v1423 = vunpack.c.l.b16 %v455
        %v1424 = vunpack.c.h.b16 %v455
        %v1425 = vunpack.c.l.b16 %v456
        %v1426 = vunpack.c.h.b16 %v456
        %v1427 = vunpack.c.l.b16 %v457
        %v1428 = vunpack.c.h.b16 %v457
        %v1429 = vunpack.c.l.b16 %v458
        %v1430 = vunpack.c.h.b16 %v458
        %v1431 = vunpack.c.l.b16 %v459
        %v1432 = vunpack.c.h.b16 %v459
        %v1433 = vunpack.c.l.b16 %v460
        %v1434 = vunpack.c.h.b16 %v460
        %v1435 = vunpack.c.l.b16 %v461
        %v1436 = vunpack.c.h.b16 %v461
        %v1437 = vunpack.c.l.b16 %v462
        %v1438 = vunpack.c.h.b16 %v462
        %v1439 = vunpack.c.l.b16 %v463
        %v1440 = vunpack.c.h.b16 %v463
        %v1441 = vunpack.c.l.b16 %v464
        %v1442 = vunpack.c.h.b16 %v464
        %v1443 = vunpack.c.l.b16 %v465
        %v1444 = vunpack.c.h.b16 %v465
        %v1445 = vunpack.c.l.b16 %v466
        %v1446 = vunpack.c.h.b16 %v466
        %v1447 = vunpack.c.l.b16 %v467
        %v1448 = vunpack.c.h.b16 %v467
        %v1449 = vunpack.c.l.b16 %v468
        %v1450 = vunpack.c.h.b16 %v468
        %v1451 = vunpack.c.l.b16 %v469
        %v1452 = vunpack.c.h.b16 %v469
        %v1453 = vunpack.c.l.b16 %v470
        %v1454 = vunpack.c.h.b16 %v470
        %v1455 = vunpack.c.l.b16 %v471
        %v1456 = vunpack.c.h.b16 %v471
        %v1457 = vunpack.c.l.b16 %v472
        %v1458 = vunpack.c.h.b16 %v472
        %v1459 = vunpack.c.l.b16 %v473
        %v1460 = vunpack.c.h.b16 %v473
        %v1461 = vunpack.c.l.b16 %v474
        %v1462 = vunpack.c.h.b16 %v474
        %v1463 = vunpack.c.l.b16 %v475
        %v1464 = vunpack.c.h.b16 %v475
        %v1465 = vunpack.c.l.b16 %v476
        %v1466 = vunpack.c.h.b16 %v476
        %v1467 = vunpack.c.l.b16 %v477
        %v1468 = vunpack.c.h.b16 %v477
        %v1469 = vunpack.c.l.b16 %v478
        %v1470 = vunpack.c.h.b16 %v478
        %v1471 = vunpack.c.l.b16 %v479
        %v1472 = vunpack.c.h.b16 %v479
        %v1473 = vunpack.c.l.b16 %v480
        %v1474 = vunpack.c.h.b16 %v480
        %v1475 = vunpack.c.l.b16 %v481
        %v1476 = vunpack.c.h.b16 %v481
        %v1477 = vunpack.c.l.b16 %v482
        %v1478 = vunpack.c.h.b16 %v482
        %v1479 = vunpack.c.l.b16 %v483
        %v1480 = vunpack.c.h.b16 %v483
        %v1481 = vunpack.c.l.b16 %v484
        %v1482 = vunpack.c.h.b16 %v484
        %v1483 = vunpack.c.l.b16 %v485
        %v1484 = vunpack.c.h.b16 %v485
        %v1485 = vunpack.c.l.b16 %v486
        %v1486 = vunpack.c.h.b16 %v486
        %v1487 = vunpack.c.l.b16 %v487
        %v1488 = vunpack.c.h.b16 %v487
        %v1489 = vunpack.c.l.b16 %v488
        %v1490 = vunpack.c.h.b16 %v488
        %v1491 = vunpack.c.l.b16 %v489
        %v1492 = vunpack.c.h.b16 %v489
        %v1493 = vunpack.c.l.b16 %v490
        %v1494 = vunpack.c.h.b16 %v490
        %v1495 = vunpack.c.l.b16 %v491
        %v1496 = vunpack.c.h.b16 %v491
        %v1497 = vunpack.c.l.b16 %v492
        %v1498 = vunpack.c.h.b16 %v492
        %v1499 = vunpack.c.l.b16 %v493
        %v1500 = vunpack.c.h.b16 %v493
        %v1501 = vunpack.c.l.b16 %v494
        %v1502 = vunpack.c.h.b16 %v494
        %v1503 = vunpack.c.l.b16 %v495
        %v1504 = vunpack.c.h.b16 %v495
        %v1505 = vunpack.c.l.b16 %v496
        %v1506 = vunpack.c.h.b16 %v496
        %v1507 = vunpack.c.l.b16 %v497
        %v1508 = vunpack.c.h.b16 %v497
        %v1509 = vunpack.c.l.b16 %v498
        %v1510 = vunpack.c.h.b16 %v498
        %v1511 = vunpack.c.l.b16 %v499
        %v1512 = vunpack.c.h.b16 %v499
        %v1513 = vunpack.c.l.b16 %v500
        %v1514 = vunpack.c.h.b16 %v500
        %v1515 = vunpack.c.l.b16 %v501
        %v1516 = vunpack.c.h.b16 %v501
        %v1517 = vunpack.c.l.b16 %v502
        %v1518 = vunpack.c.h.b16 %v502
        %v1519 = vunpack.c.l.b16 %v503
        %v1520 = vunpack.c.h.b16 %v503
        %v1521 = vunpack.c.l.b16 %v504
        %v1522 = vunpack.c.h.b16 %v504
        %v1523 = vunpack.c.l.b16 %v505
        %v1524 = vunpack.c.h.b16 %v505
        %v1525 = vunpack.c.l.b16 %v506
        %v1526 = vunpack.c.h.b16 %v506
        %v1527 = vunpack.c.l.b16 %v507
        %v1528 = vunpack.c.h.b16 %v507
        %v1529 = vunpack.c.l.b16 %v508
        %v1530 = vunpack.c.h.b16 %v508
        %v1531 = vunpack.c.l.b16 %v509
        %v1532 = vunpack.c.h.b16 %v509
        %v1533 = vunpack.c.l.b16 %v510
        %v1534 = vunpack.c.h.b16 %v510
        %v1535 = vunpack.c.l.b16 %v511
        %v1536 = vunpack.c.h.b16 %v511
        %v1537 = vunpack.c.l.b16 %v512
        %v1538 = vunpack.c.h.b16 %v512
        %v1539 = vunpack.c.l.b16 %v513
        %v1540 = vunpack.c.h.b16 %v513
        %v1541 = vunpack.c.l.b16 %v514
        %v1542 = vunpack.c.h.b16 %v514
        %v1543 = vunpack.c.l.b16 %v515
        %v1544 = vunpack.c.h.b16 %v515
        %v1545 = vunpack.c.l.b16 %v516
        %v1546 = vunpack.c.h.b16 %v516
        %v1547 = vunpack.c.l.b16 %v517
        %v1548 = vunpack.c.h.b16 %v517
        %v1549 = vunpack.c.l.b16 %v518
        %v1550 = vunpack.c.h.b16 %v518
        %v1551 = vunpack.c.l.b16 %v519
        %v1552 = vunpack.c.h.b16 %v519
        %v1553 = vunpack.c.l.b16 %v520
        %v1554 = vunpack.c.h.b16 %v520
        %v1555 = vunpack.c.l.b16 %v521
        %v1556 = vunpack.c.h.b16 %v521
        %v1557 = vunpack.c.l.b16 %v522
        %v1558 = vunpack.c.h.b16 %v522
        %v1559 = vunpack.c.l.b16 %v523
        %v1560 = vunpack.c.h.b16 %v523
        %v1561 = vunpack.c.l.b16 %v524
        %v1562 = vunpack.c.h.b16 %v524
        %v1563 = vunpack.c.l.b16 %v525
        %v1564 = vunpack.c.h.b16 %v525
        %v1565 = vunpack.c.l.b16 %v526
        %v1566 = vunpack.c.h.b16 %v526
        %v1567 = vunpack.c.l.b16 %v527
        %v1568 = vunpack.c.h.b16 %v527
        %v1569 = vunpack.c.l.b16 %v528
        %v1570 = vunpack.c.h.b16 %v528
        %v1571 = vunpack.c.l.b16 %v529
        %v1572 = vunpack.c.h.b16 %v529
        %v1573 = vunpack.c.l.b16 %v530
        %v1574 = vunpack.c.h.b16 %v530
        %v1575 = vunpack.c.l.b16 %v531
        %v1576 = vunpack.c.h.b16 %v531
        %v1577 = vunpack.c.l.b16 %v532
        %v1578 = vunpack.c.h.b16 %v532
        %v1579 = vunpack.c.l.b16 %v533
        %v1580 = vunpack.c.h.b16 %v533
        %v1581 = vunpack.c.l.b16 %v534
        %v1582 = vunpack.c.h.b16 %v534
        %v1583 = vunpack.c.l.b16 %v535
        %v1584 = vunpack.c.h.b16 %v535
        %v1585 = vunpack.c.l.b16 %v536
        %v1586 = vunpack.c.h.b16 %v536
        %v1587 = vunpack.c.l.b16 %v537
        %v1588 = vunpack.c.h.b16 %v537
        %v1589 = vunpack.c.l.b16 %v538
        %v1590 = vunpack.c.h.b16 %v538
        %v1591 = vunpack.c.l.b16 %v539
        %v1592 = vunpack.c.h.b16 %v539
        %v1593 = vunpack.c.l.b16 %v540
        %v1594 = vunpack.c.h.b16 %v540
        %v1595 = vunpack.c.l.b16 %v541
        %v1596 = vunpack.c.h.b16 %v541
        %v1597 = vunpack.c.l.b16 %v542
        %v1598 = vunpack.c.h.b16 %v542
        %v1599 = vunpack.c.l.b16 %v543
        %v1600 = vunpack.c.h.b16 %v543
        %v1601 = vunpack.c.l.b16 %v544
        %v1602 = vunpack.c.h.b16 %v544
        %v1603 = vunpack.c.l.b16 %v545
        %v1604 = vunpack.c.h.b16 %v545
        %v1605 = vunpack.c.l.b16 %v546
        %v1606 = vunpack.c.h.b16 %v546
        %v1607 = vunpack.c.l.b16 %v547
        %v1608 = vunpack.c.h.b16 %v547
        %v1609 = vunpack.c.l.b16 %v548
        %v1610 = vunpack.c.h.b16 %v548
        %v1611 = vunpack.c.l.b16 %v549
        %v1612 = vunpack.c.h.b16 %v549
        %v1613 = vunpack.c.l.b16 %v550
        %v1614 = vunpack.c.h.b16 %v550
        %v1615 = vunpack.c.l.b16 %v551
        %v1616 = vunpack.c.h.b16 %v551
        %v1617 = vunpack.c.l.b16 %v552
        %v1618 = vunpack.c.h.b16 %v552
        %v1619 = vunpack.c.l.b16 %v553
        %v1620 = vunpack.c.h.b16 %v553
        %v1621 = vunpack.c.l.b16 %v554
        %v1622 = vunpack.c.h.b16 %v554
        %v1623 = vunpack.c.l.b16 %v555
        %v1624 = vunpack.c.h.b16 %v555
        %v1625 = vunpack.c.l.b16 %v556
        %v1626 = vunpack.c.h.b16 %v556
        %v1627 = vunpack.c.l.b16 %v557
        %v1628 = vunpack.c.h.b16 %v557
        %v1629 = vunpack.c.l.b16 %v558
        %v1630 = vunpack.c.h.b16 %v558
        %v1631 = vunpack.c.l.b16 %v559
        %v1632 = vunpack.c.h.b16 %v559
        %v1633 = vunpack.c.l.b16 %v560
        %v1634 = vunpack.c.h.b16 %v560
        %v1635 = vunpack.c.l.b16 %v561
        %v1636 = vunpack.c.h.b16 %v561
        %v1637 = vunpack.c.l.b16 %v562
        %v1638 = vunpack.c.h.b16 %v562
        %v1639 = vunpack.c.l.b16 %v563
        %v1640 = vunpack.c.h.b16 %v563
        %v1641 = vunpack.c.l.b16 %v564
        %v1642 = vunpack.c.h.b16 %v564
        %v1643 = vunpack.c.l.b16 %v565
        %v1644 = vunpack.c.h.b16 %v565
        %v1645 = vunpack.c.l.b16 %v566
        %v1646 = vunpack.c.h.b16 %v566
        %v1647 = vunpack.c.l.b16 %v567
        %v1648 = vunpack.c.h.b16 %v567
        %v1649 = vunpack.c.l.b16 %v568
        %v1650 = vunpack.c.h.b16 %v568
        %v1651 = vunpack.c.l.b16 %v569
        %v1652 = vunpack.c.h.b16 %v569
        %v1653 = vunpack.c.l.b16 %v570
        %v1654 = vunpack.c.h.b16 %v570
        %v1655 = vunpack.c.l.b16 %v571
        %v1656 = vunpack.c.h.b16 %v571
        %v1657 = vunpack.c.l.b16 %v572
        %v1658 = vunpack.c.h.b16 %v572
        %v1659 = vunpack.c.l.b16 %v573
        %v1660 = vunpack.c.h.b16 %v573
        %v1661 = vunpack.c.l.b16 %v574
        %v1662 = vunpack.c.h.b16 %v574
        %v1663 = vunpack.c.l.b16 %v575
        %v1664 = vunpack.c.h.b16 %v575
        %v1665 = vunpack.c.l.b16 %v576
        %v1666 = vunpack.c.h.b16 %v576
        %v1667 = vunpack.c.l.b16 %v577
        %v1668 = vunpack.c.h.b16 %v577
        %v1669 = vunpack.c.l.b16 %v578
        %v1670 = vunpack.c.h.b16 %v578
        %v1671 = vunpack.c.l.b16 %v579
        %v1672 = vunpack.c.h.b16 %v579
        %v1673 = vunpack.c.l.b16 %v580
        %v1674 = vunpack.c.h.b16 %v580
        %v1675 = vunpack.c.l.b16 %v581
        %v1676 = vunpack.c.h.b16 %v581
        %v1677 = vunpack.c.l.b16 %v582
        %v1678 = vunpack.c.h.b16 %v582
        %v1679 = vunpack.c.l.b16 %v583
        %v1680 = vunpack.c.h.b16 %v583
        %v1681 = vunpack.c.l.b16 %v584
        %v1682 = vunpack.c.h.b16 %v584
        %v1683 = vunpack.c.l.b16 %v585
        %v1684 = vunpack.c.h.b16 %v585
        %v1685 = vunpack.c.l.b16 %v586
        %v1686 = vunpack.c.h.b16 %v586
        %v1687 = vunpack.c.l.b16 %v587
        %v1688 = vunpack.c.h.b16 %v587
        %v1689 = vunpack.c.l.b16 %v588
        %v1690 = vunpack.c.h.b16 %v588
        %v1691 = vunpack.c.l.b16 %v589
        %v1692 = vunpack.c.h.b16 %v589
        %v1693 = vunpack.c.l.b16 %v590
        %v1694 = vunpack.c.h.b16 %v590
        %v1695 = vunpack.c.l.b16 %v591
        %v1696 = vunpack.c.h.b16 %v591
        %v1697 = vunpack.c.l.b16 %v592
        %v1698 = vunpack.c.h.b16 %v592
        %v1699 = vunpack.c.l.b16 %v593
        %v1700 = vunpack.c.h.b16 %v593
        %v1701 = vunpack.c.l.b16 %v594
        %v1702 = vunpack.c.h.b16 %v594
        %v1703 = vunpack.c.l.b16 %v595
        %v1704 = vunpack.c.h.b16 %v595
        %v1705 = vunpack.c.l.b16 %v596
        %v1706 = vunpack.c.h.b16 %v596
        %v1707 = vunpack.c.l.b16 %v597
        %v1708 = vunpack.c.h.b16 %v597
        %v1709 = vunpack.c.l.b16 %v598
        %v1710 = vunpack.c.h.b16 %v598
        %v1711 = vunpack.c.l.b16 %v599
        %v1712 = vunpack.c.h.b16 %v599
        %v1713 = vunpack.c.l.b16 %v600
        %v1714 = vunpack.c.h.b16 %v600
        %v1715 = vunpack.c.l.b16 %v601
        %v1716 = vunpack.c.h.b16 %v601
        %v1717 = vunpack.c.l.b16 %v602
        %v1718 = vunpack.c.h.b16 %v602
        %v1719 = vunpack.c.l.b16 %v603
        %v1720 = vunpack.c.h.b16 %v603
        %v1721 = vunpack.c.l.b16 %v604
        %v1722 = vunpack.c.h.b16 %v604
        %v1723 = vunpack.c.l.b16 %v605
        %v1724 = vunpack.c.h.b16 %v605
        %v1725 = vunpack.c.l.b16 %v606
        %v1726 = vunpack.c.h.b16 %v606
        %v1727 = vunpack.c.l.b16 %v607
        %v1728 = vunpack.c.h.b16 %v607
        %v1729 = vunpack.c.l.b16 %v608
        %v1730 = vunpack.c.h.b16 %v608
        %v1731 = vunpack.c.l.b16 %v609
        %v1732 = vunpack.c.h.b16 %v609
        %v1733 = vunpack.c.l.b16 %v610
        %v1734 = vunpack.c.h.b16 %v610
        %v1735 = vunpack.c.l.b16 %v611
        %v1736 = vunpack.c.h.b16 %v611
        %v1737 = vunpack.c.l.b16 %v612
        %v1738 = vunpack.c.h.b16 %v612
        %v1739 = vunpack.c.l.b16 %v613
        %v1740 = vunpack.c.h.b16 %v613
        %v1741 = vunpack.c.l.b16 %v614
        %v1742 = vunpack.c.h.b16 %v614
        %v1743 = vunpack.c.l.b16 %v615
        %v1744 = vunpack.c.h.b16 %v615
        %v1745 = vunpack.c.l.b16 %v616
        %v1746 = vunpack.c.h.b16 %v616
        %v1747 = vunpack.c.l.b16 %v617
        %v1748 = vunpack.c.h.b16 %v617
        %v1749 = vunpack.c.l.b16 %v618
        %v1750 = vunpack.c.h.b16 %v618
        %v1751 = vunpack.c.l.b16 %v619
        %v1752 = vunpack.c.h.b16 %v619
        %v1753 = vunpack.c.l.b16 %v620
        %v1754 = vunpack.c.h.b16 %v620
        %v1755 = vunpack.c.l.b16 %v621
        %v1756 = vunpack.c.h.b16 %v621
        %v1757 = vunpack.c.l.b16 %v622
        %v1758 = vunpack.c.h.b16 %v622
        %v1759 = vunpack.c.l.b16 %v623
        %v1760 = vunpack.c.h.b16 %v623
        %v1761 = vunpack.c.l.b16 %v624
        %v1762 = vunpack.c.h.b16 %v624
        %v1763 = vunpack.c.l.b16 %v625
        %v1764 = vunpack.c.h.b16 %v625
        %v1765 = vunpack.c.l.b16 %v626
        %v1766 = vunpack.c.h.b16 %v626
        %v1767 = vunpack.c.l.b16 %v627
        %v1768 = vunpack.c.h.b16 %v627
        %v1769 = vunpack.c.l.b16 %v628
        %v1770 = vunpack.c.h.b16 %v628
        %v1771 = vunpack.c.l.b16 %v629
        %v1772 = vunpack.c.h.b16 %v629
        %v1773 = vunpack.c.l.b16 %v630
        %v1774 = vunpack.c.h.b16 %v630
        %v1775 = vunpack.c.l.b16 %v631
        %v1776 = vunpack.c.h.b16 %v631
        %v1777 = vunpack.c.l.b16 %v632
        %v1778 = vunpack.c.h.b16 %v632
        %v1779 = vunpack.c.l.b16 %v633
        %v1780 = vunpack.c.h.b16 %v633
        %v1781 = vunpack.c.l.b16 %v634
        %v1782 = vunpack.c.h.b16 %v634
        %v1783 = vunpack.c.l.b16 %v635
        %v1784 = vunpack.c.h.b16 %v635
        %v1785 = vunpack.c.l.b16 %v636
        %v1786 = vunpack.c.h.b16 %v636
        %v1787 = vunpack.c.l.b16 %v637
        %v1788 = vunpack.c.h.b16 %v637
        %v1789 = vunpack.c.l.b16 %v638
        %v1790 = vunpack.c.h.b16 %v638
        %v1791 = vunpack.c.l.b16 %v639
        %v1792 = vunpack.c.h.b16 %v639
        %v1793 = vunpack.c.l.b16 %v640
        %v1794 = vunpack.c.h.b16 %v640
        %v1795 = vunpack.c.l.b16 %v641
        %v1796 = vunpack.c.h.b16 %v641
        %v1797 = vunpack.c.l.b16 %v642
        %v1798 = vunpack.c.h.b16 %v642
        %v1799 = vunpack.c.l.b16 %v643
        %v1800 = vunpack.c.h.b16 %v643
        %v1801 = vunpack.c.l.b16 %v644
        %v1802 = vunpack.c.h.b16 %v644
        %v1803 = vunpack.c.l.b16 %v645
        %v1804 = vunpack.c.h.b16 %v645
        %v1805 = vunpack.c.l.b16 %v646
        %v1806 = vunpack.c.h.b16 %v646
        %v1807 = vunpack.c.l.b16 %v647
        %v1808 = vunpack.c.h.b16 %v647
        %v1809 = vunpack.c.l.b16 %v648
        %v1810 = vunpack.c.h.b16 %v648
        %v1811 = vunpack.c.l.b16 %v649
        %v1812 = vunpack.c.h.b16 %v649
        %v1813 = vunpack.c.l.b16 %v650
        %v1814 = vunpack.c.h.b16 %v650
        %v1815 = vunpack.c.l.b16 %v651
        %v1816 = vunpack.c.h.b16 %v651
        %v1817 = vunpack.c.l.b16 %v652
        %v1818 = vunpack.c.h.b16 %v652
        %v1819 = vunpack.c.l.b16 %v653
        %v1820 = vunpack.c.h.b16 %v653
        %v1821 = vunpack.c.l.b16 %v654
        %v1822 = vunpack.c.h.b16 %v654
        %v1823 = vunpack.c.l.b16 %v655
        %v1824 = vunpack.c.h.b16 %v655
        %v1825 = vunpack.c.l.b16 %v656
        %v1826 = vunpack.c.h.b16 %v656
        %v1827 = vunpack.c.l.b16 %v657
        %v1828 = vunpack.c.h.b16 %v657
        %v1829 = vunpack.c.l.b16 %v658
        %v1830 = vunpack.c.h.b16 %v658
        %v1831 = vunpack.c.l.b16 %v659
        %v1832 = vunpack.c.h.b16 %v659
        %v1833 = vunpack.c.l.b16 %v660
        %v1834 = vunpack.c.h.b16 %v660
        %v1835 = vunpack.c.l.b16 %v661
        %v1836 = vunpack.c.h.b16 %v661
        %v1837 = vunpack.c.l.b16 %v662
        %v1838 = vunpack.c.h.b16 %v662
        %v1839 = vunpack.c.l.b16 %v663
        %v1840 = vunpack.c.h.b16 %v663
        %v1841 = vunpack.c.l.b16 %v664
        %v1842 = vunpack.c.h.b16 %v664
        %v1843 = vunpack.c.l.b16 %v665
        %v1844 = vunpack.c.h.b16 %v665
        %v1845 = vunpack.c.l.b16 %v666
        %v1846 = vunpack.c.h.b16 %v666
        %v1847 = vpack.c.b16 %v1085, %v1079
        %v1848 = vpack.c.b16 %v1086, %v1080
        %v1849 = vpack.c.b16 %v1087, %v1081
        %v1850 = vpack.c.b16 %v1088, %v1082
        %v1851 = vpack.c.b16 %v1089, %v1083
        %v1852 = vpack.c.b16 %v1090, %v1084
        %v1853 = vpack.c.b16 %v1097, %v1091
        %v1854 = vpack.c.b16 %v1098, %v1092
        %v1855 = vpack.c.b16 %v1099, %v1093
        %v1856 = vpack.c.b16 %v1100, %v1094
        %v1857 = vpack.c.b16 %v1101, %v1095
        %v1858 = vpack.c.b16 %v1102, %v1096
        %v1859 = vpack.c.b16 %v1109, %v1103
        %v1860 = vpack.c.b16 %v1110, %v1104
        %v1861 = vpack.c.b16 %v1111, %v1105
        %v1862 = vpack.c.b16 %v1112, %v1106
        %v1863 = vpack.c.b16 %v1113, %v1107
        %v1864 = vpack.c.b16 %v1114, %v1108
        %v1865 = vpack.c.b16 %v1121, %v1115
        %v1866 = vpack.c.b16 %v1122, %v1116
        %v1867 = vpack.c.b16 %v1123, %v1117
        %v1868 = vpack.c.b16 %v1124, %v1118
        %v1869 = vpack.c.b16 %v1125, %v1119
        %v1870 = vpack.c.b16 %v1126, %v1120
        %v1871 = vpack.c.b16 %v1133, %v1127
        %v1872 = vpack.c.b16 %v1134, %v1128
        %v1873 = vpack.c.b16 %v1135, %v1129
        %v1874 = vpack.c.b16 %v1136, %v1130
        %v1875 = vpack.c.b16 %v1137, %v1131
        %v1876 = vpack.c.b16 %v1138, %v1132
        %v1877 = vpack.c.b16 %v1145, %v1139
        %v1878 = vpack.c.b16 %v1146, %v1140
        %v1879 = vpack.c.b16 %v1147, %v1141
        %v1880 = vpack.c.b16 %v1148, %v1142
        %v1881 = vpack.c.b16 %v1149, %v1143
        %v1882 = vpack.c.b16 %v1150, %v1144
        %v1883 = vpack.c.b16 %v1157, %v1151
        %v1884 = vpack.c.b16 %v1158, %v1152
        %v1885 = vpack.c.b16 %v1159, %v1153
        %v1886 = vpack.c.b16 %v1160, %v1154
        %v1887 = vpack.c.b16 %v1161, %v1155
        %v1888 = vpack.c.b16 %v1162, %v1156
        %v1889 = vpack.c.b16 %v1169, %v1163
        %v1890 = vpack.c.b16 %v1170, %v1164
        %v1891 = vpack.c.b16 %v1171, %v1165
        %v1892 = vpack.c.b16 %v1172, %v1166
        %v1893 = vpack.c.b16 %v1173, %v1167
        %v1894 = vpack.c.b16 %v1174, %v1168
        %v1895 = vpack.c.b16 %v1181, %v1175
        %v1896 = vpack.c.b16 %v1182, %v1176
        %v1897 = vpack.c.b16 %v1183, %v1177
        %v1898 = vpack.c.b16 %v1184, %v1178
        %v1899 = vpack.c.b16 %v1185, %v1179
        %v1900 = vpack.c.b16 %v1186, %v1180
        %v1901 = vpack.c.b16 %v1193, %v1187
        %v1902 = vpack.c.b16 %v1194, %v1188
        %v1903 = vpack.c.b16 %v1195, %v1189
        %v1904 = vpack.c.b16 %v1196, %v1190
        %v1905 = vpack.c.b16 %v1197, %v1191
        %v1906 = vpack.c.b16 %v1198, %v1192
        %v1907 = vpack.c.b16 %v1205, %v1199
        %v1908 = vpack.c.b16 %v1206, %v1200
        %v1909 = vpack.c.b16 %v1207, %v1201
        %v1910 = vpack.c.b16 %v1208, %v1202
        %v1911 = vpack.c.b16 %v1209, %v1203
        %v1912 = vpack.c.b16 %v1210, %v1204
        %v1913 = vpack.c.b16 %v1217, %v1211
        %v1914 = vpack.c.b16 %v1218, %v1212
        %v1915 = vpack.c.b16 %v1219, %v1213
        %v1916 = vpack.c.b16 %v1220, %v1214
        %v1917 = vpack.c.b16 %v1221, %v1215
        %v1918 = vpack.c.b16 %v1222, %v1216
        %v1919 = vpack.c.b16 %v1229, %v1223
        %v1920 = vpack.c.b16 %v1230, %v1224
        %v1921 = vpack.c.b16 %v1231, %v1225
        %v1922 = vpack.c.b16 %v1232, %v1226
        %v1923 = vpack.c.b16 %v1233, %v1227
        %v1924 = vpack.c.b16 %v1234, %v1228
        %v1925 = vpack.c.b16 %v1241, %v1235
        %v1926 = vpack.c.b16 %v1242, %v1236
        %v1927 = vpack.c.b16 %v1243, %v1237
        %v1928 = vpack.c.b16 %v1244, %v1238
        %v1929 = vpack.c.b16 %v1245, %v1239
        %v1930 = vpack.c.b16 %v1246, %v1240
        %v1931 = vpack.c.b16 %v1253, %v1247
        %v1932 = vpack.c.b16 %v1254, %v1248
        %v1933 = vpack.c.b16 %v1255, %v1249
        %v1934 = vpack.c.b16 %v1256, %v1250
        %v1935 = vpack.c.b16 %v1257, %v1251
        %v1936 = vpack.c.b16 %v1258, %v1252
        %v1937 = vpack.c.b16 %v1265, %v1259
        %v1938 = vpack.c.b16 %v1266, %v1260
        %v1939 = vpack.c.b16 %v1267, %v1261
        %v1940 = vpack.c.b16 %v1268, %v1262
        %v1941 = vpack.c.b16 %v1269, %v1263
        %v1942 = vpack.c.b16 %v1270, %v1264
        %v1943 = vpack.c.b16 %v1277, %v1271
        %v1944 = vpack.c.b16 %v1278, %v1272
        %v1945 = vpack.c.b16 %v1279, %v1273
        %v1946 = vpack.c.b16 %v1280, %v1274
        %v1947 = vpack.c.b16 %v1281, %v1275
        %v1948 = vpack.c.b16 %v1282, %v1276
        %v1949 = vpack.c.b16 %v1289, %v1283
        %v1950 = vpack.c.b16 %v1290, %v1284
        %v1951 = vpack.c.b16 %v1291, %v1285
        %v1952 = vpack.c.b16 %v1292, %v1286
        %v1953 = vpack.c.b16 %v1293, %v1287
        %v1954 = vpack.c.b16 %v1294, %v1288
        %v1955 = vpack.c.b16 %v1301, %v1295
        %v1956 = vpack.c.b16 %v1302, %v1296
        %v1957 = vpack.c.b16 %v1303, %v1297
        %v1958 = vpack.c.b16 %v1304, %v1298
        %v1959 = vpack.c.b16 %v1305, %v1299
        %v1960 = vpack.c.b16 %v1306, %v1300
        %v1961 = vpack.c.b16 %v1313, %v1307
        %v1962 = vpack.c.b16 %v1314, %v1308
        %v1963 = vpack.c.b16 %v1315, %v1309
        %v1964 = vpack.c.b16 %v1316, %v1310
        %v1965 = vpack.c.b16 %v1317, %v1311
        %v1966 = vpack.c.b16 %v1318, %v1312
        %v1967 = vpack.c.b16 %v1325, %v1319
        %v1968 = vpack.c.b16 %v1326, %v1320
        %v1969 = vpack.c.b16 %v1327, %v1321
        %v1970 = vpack.c.b16 %v1328, %v1322
        %v1971 = vpack.c.b16 %v1329, %v1323
        %v1972 = vpack.c.b16 %v1330, %v1324
        %v1973 = vpack.c.b16 %v1337, %v1331
        %v1974 = vpack.c.b16 %v1338, %v1332
        %v1975 = vpack.c.b16 %v1339, %v1333
        %v1976 = vpack.c.b16 %v1340, %v1334
        %v1977 = vpack.c.b16 %v1341, %v1335
        %v1978 = vpack.c.b16 %v1342, %v1336
        %v1979 = vpack.c.b16 %v1349, %v1343
        %v1980 = vpack.c.b16 %v1350, %v1344
        %v1981 = vpack.c.b16 %v1351, %v1345
        %v1982 = vpack.c.b16 %v1352, %v1346
        %v1983 = vpack.c.b16 %v1353, %v1347
        %v1984 = vpack.c.b16 %v1354, %v1348
        %v1985 = vpack.c.b16 %v1361, %v1355
        %v1986 = vpack.c.b16 %v1362, %v1356
        %v1987 = vpack.c.b16 %v1363, %v1357
        %v1988 = vpack.c.b16 %v1364, %v1358
        %v1989 = vpack.c.b16 %v1365, %v1359
        %v1990 = vpack.c.b16 %v1366, %v1360
        %v1991 = vpack.c.b16 %v1373, %v1367
        %v1992 = vpack.c.b16 %v1374, %v1368
        %v1993 = vpack.c.b16 %v1375, %v1369
        %v1994 = vpack.c.b16 %v1376, %v1370
        %v1995 = vpack.c.b16 %v1377, %v1371
        %v1996 = vpack.c.b16 %v1378, %v1372
        %v1997 = vpack.c.b16 %v1385, %v1379
        %v1998 = vpack.c.b16 %v1386, %v1380
        %v1999 = vpack.c.b16 %v1387, %v1381
        %v2000 = vpack.c.b16 %v1388, %v1382
        %v2001 = vpack.c.b16 %v1389, %v1383
        %v2002 = vpack.c.b16 %v1390, %v1384
        %v2003 = vpack.c.b16 %v1397, %v1391
        %v2004 = vpack.c.b16 %v1398, %v1392
        %v2005 = vpack.c.b16 %v1399, %v1393
        %v2006 = vpack.c.b16 %v1400, %v1394
        %v2007 = vpack.c.b16 %v1401, %v1395
        %v2008 = vpack.c.b16 %v1402, %v1396
        %v2009 = vpack.c.b16 %v1409, %v1403
        %v2010 = vpack.c.b16 %v1410, %v1404
        %v2011 = vpack.c.b16 %v1411, %v1405
        %v2012 = vpack.c.b16 %v1412, %v1406
        %v2013 = vpack.c.b16 %v1413, %v1407
        %v2014 = vpack.c.b16 %v1414, %v1408
        %v2015 = vpack.c.b16 %v1421, %v1415
        %v2016 = vpack.c.b16 %v1422, %v1416
        %v2017 = vpack.c.b16 %v1423, %v1417
        %v2018 = vpack.c.b16 %v1424, %v1418
        %v2019 = vpack.c.b16 %v1425, %v1419
        %v2020 = vpack.c.b16 %v1426, %v1420
        %v2021 = vpack.c.b16 %v1433, %v1427
        %v2022 = vpack.c.b16 %v1434, %v1428
        %v2023 = vpack.c.b16 %v1435, %v1429
        %v2024 = vpack.c.b16 %v1436, %v1430
        %v2025 = vpack.c.b16 %v1437, %v1431
        %v2026 = vpack.c.b16 %v1438, %v1432
        %v2027 = vpack.c.b16 %v1445, %v1439
        %v2028 = vpack.c.b16 %v1446, %v1440
        %v2029 = vpack.c.b16 %v1447, %v1441
        %v2030 = vpack.c.b16 %v1448, %v1442
        %v2031 = vpack.c.b16 %v1449, %v1443
        %v2032 = vpack.c.b16 %v1450, %v1444
        %v2033 = vpack.c.b16 %v1457, %v1451
        %v2034 = vpack.c.b16 %v1458, %v1452
        %v2035 = vpack.c.b16 %v1459, %v1453
        %v2036 = vpack.c.b16 %v1460, %v1454
        %v2037 = vpack.c.b16 %v1461, %v1455
        %v2038 = vpack.c.b16 %v1462, %v1456
        %v2039 = vpack.c.b16 %v1469, %v1463
        %v2040 = vpack.c.b16 %v1470, %v1464
        %v2041 = vpack.c.b16 %v1471, %v1465
        %v2042 = vpack.c.b16 %v1472, %v1466
        %v2043 = vpack.c.b16 %v1473, %v1467
        %v2044 = vpack.c.b16 %v1474, %v1468
        %v2045 = vpack.c.b16 %v1481, %v1475
        %v2046 = vpack.c.b16 %v1482, %v1476
        %v2047 = vpack.c.b16 %v1483, %v1477
        %v2048 = vpack.c.b16 %v1484, %v1478
        %v2049 = vpack.c.b16 %v1485, %v1479
        %v2050 = vpack.c.b16 %v1486, %v1480
        %v2051 = vpack.c.b16 %v1493, %v1487
        %v2052 = vpack.c.b16 %v1494, %v1488
        %v2053 = vpack.c.b16 %v1495, %v1489
        %v2054 = vpack.c.b16 %v1496, %v1490
        %v2055 = vpack.c.b16 %v1497, %v1491
        %v2056 = vpack.c.b16 %v1498, %v1492
        %v2057 = vpack.c.b16 %v1505, %v1499
        %v2058 = vpack.c.b16 %v1506, %v1500
        %v2059 = vpack.c.b16 %v1507, %v1501
        %v2060 = vpack.c.b16 %v1508, %v1502
        %v2061 = vpack.c.b16 %v1509, %v1503
        %v2062 = vpack.c.b16 %v1510, %v1504
        %v2063 = vpack.c.b16 %v1517, %v1511
        %v2064 = vpack.c.b16 %v1518, %v1512
        %v2065 = vpack.c.b16 %v1519, %v1513
        %v2066 = vpack.c.b16 %v1520, %v1514
        %v2067 = vpack.c.b16 %v1521, %v1515
        %v2068 = vpack.c.b16 %v1522, %v1516
        %v2069 = vpack.c.b16 %v1529, %v1523
        %v2070 = vpack.c.b16 %v1530, %v1524
        %v2071 = vpack.c.b16 %v1531, %v1525
        %v2072 = vpack.c.b16 %v1532, %v1526
        %v2073 = vpack.c.b16 %v1533, %v1527
        %v2074 = vpack.c.b16 %v1534, %v1528
        %v2075 = vpack.c.b16 %v1541, %v1535
        %v2076 = vpack.c.b16 %v1542, %v1536
        %v2077 = vpack.c.b16 %v1543, %v1537
        %v2078 = vpack.c.b16 %v1544, %v1538
        %v2079 = vpack.c.b16 %v1545, %v1539
        %v2080 = vpack.c.b16 %v1546, %v1540
        %v2081 = vpack.c.b16 %v1553, %v1547
        %v2082 = vpack.c.b16 %v1554, %v1548
        %v2083 = vpack.c.b16 %v1555, %v1549
        %v2084 = vpack.c.b16 %v1556, %v1550
        %v2085 = vpack.c.b16 %v1557, %v1551
        %v2086 = vpack.c.b16 %v1558, %v1552
        %v2087 = vpack.c.b16 %v1565, %v1559
        %v2088 = vpack.c.b16 %v1566, %v1560
        %v2089 = vpack.c.b16 %v1567, %v1561
        %v2090 = vpack.c.b16 %v1568, %v1562
        %v2091 = vpack.c.b16 %v1569, %v1563
        %v2092 = vpack.c.b16 %v1570, %v1564
        %v2093 = vpack.c.b16 %v1577, %v1571
        %v2094 = vpack.c.b16 %v1578, %v1572
        %v2095 = vpack.c.b16 %v1579, %v1573
        %v2096 = vpack.c.b16 %v1580, %v1574
        %v2097 = vpack.c.b16 %v1581, %v1575
        %v2098 = vpack.c.b16 %v1582, %v1576
        %v2099 = vpack.c.b16 %v1589, %v1583
        %v2100 = vpack.c.b16 %v1590, %v1584
        %v2101 = vpack.c.b16 %v1591, %v1585
        %v2102 = vpack.c.b16 %v1592, %v1586
        %v2103 = vpack.c.b16 %v1593, %v1587
        %v2104 = vpack.c.b16 %v1594, %v1588
        %v2105 = vpack.c.b16 %v1601, %v1595
        %v2106 = vpack.c.b16 %v1602, %v1596
        %v2107 = vpack.c.b16 %v1603, %v1597
        %v2108 = vpack.c.b16 %v1604, %v1598
        %v2109 = vpack.c.b16 %v1605, %v1599
        %v2110 = vpack.c.b16 %v1606, %v1600
        %v2111 = vpack.c.b16 %v1613, %v1607
        %v2112 = vpack.c.b16 %v1614, %v1608
        %v2113 = vpack.c.b16 %v1615, %v1609
        %v2114 = vpack.c.b16 %v1616, %v1610
        %v2115 = vpack.c.b16 %v1617, %v1611
        %v2116 = vpack.c.b16 %v1618, %v1612
        %v2117 = vpack.c.b16 %v1625, %v1619
        %v2118 = vpack.c.b16 %v1626, %v1620
        %v2119 = vpack.c.b16 %v1627, %v1621
        %v2120 = vpack.c.b16 %v1628, %v1622
        %v2121 = vpack.c.b16 %v1629, %v1623
        %v2122 = vpack.c.b16 %v1630, %v1624
        %v2123 = vpack.c.b16 %v1637, %v1631
        %v2124 = vpack.c.b16 %v1638, %v1632
        %v2125 = vpack.c.b16 %v1639, %v1633
        %v2126 = vpack.c.b16 %v1640, %v1634
        %v2127 = vpack.c.b16 %v1641, %v1635
        %v2128 = vpack.c.b16 %v1642, %v1636
        %v2129 = vpack.c.b16 %v1649, %v1643
        %v2130 = vpack.c.b16 %v1650, %v1644
        %v2131 = vpack.c.b16 %v1651, %v1645
        %v2132 = vpack.c.b16 %v1652, %v1646
        %v2133 = vpack.c.b16 %v1653, %v1647
        %v2134 = vpack.c.b16 %v1654, %v1648
        %v2135 = vpack.c.b16 %v1661, %v1655
        %v2136 = vpack.c.b16 %v1662, %v1656
        %v2137 = vpack.c.b16 %v1663, %v1657
        %v2138 = vpack.c.b16 %v1664, %v1658
        %v2139 = vpack.c.b16 %v1665, %v1659
        %v2140 = vpack.c.b16 %v1666, %v1660
        %v2141 = vpack.c.b16 %v1673, %v1667
        %v2142 = vpack.c.b16 %v1674, %v1668
        %v2143 = vpack.c.b16 %v1675, %v1669
        %v2144 = vpack.c.b16 %v1676, %v1670
        %v2145 = vpack.c.b16 %v1677, %v1671
        %v2146 = vpack.c.b16 %v1678, %v1672
        %v2147 = vpack.c.b16 %v1685, %v1679
        %v2148 = vpack.c.b16 %v1686, %v1680
        %v2149 = vpack.c.b16 %v1687, %v1681
        %v2150 = vpack.c.b16 %v1688, %v1682
        %v2151 = vpack.c.b16 %v1689, %v1683
        %v2152 = vpack.c.b16 %v1690, %v1684
        %v2153 = vpack.c.b16 %v1697, %v1691
        %v2154 = vpack.c.b16 %v1698, %v1692
        %v2155 = vpack.c.b16 %v1699, %v1693
        %v2156 = vpack.c.b16 %v1700, %v1694
        %v2157 = vpack.c.b16 %v1701, %v1695
        %v2158 = vpack.c.b16 %v1702, %v1696
        %v2159 = vpack.c.b16 %v1709, %v1703
        %v2160 = vpack.c.b16 %v1710, %v1704
        %v2161 = vpack.c.b16 %v1711, %v1705
        %v2162 = vpack.c.b16 %v1712, %v1706
        %v2163 = vpack.c.b16 %v1713, %v1707
        %v2164 = vpack.c.b16 %v1714, %v1708
        %v2165 = vpack.c.b16 %v1721, %v1715
        %v2166 = vpack.c.b16 %v1722, %v1716
        %v2167 = vpack.c.b16 %v1723, %v1717
        %v2168 = vpack.c.b16 %v1724, %v1718
        %v2169 = vpack.c.b16 %v1725, %v1719
        %v2170 = vpack.c.b16 %v1726, %v1720
        %v2171 = vpack.c.b16 %v1733, %v1727
        %v2172 = vpack.c.b16 %v1734, %v1728
        %v2173 = vpack.c.b16 %v1735, %v1729
        %v2174 = vpack.c.b16 %v1736, %v1730
        %v2175 = vpack.c.b16 %v1737, %v1731
        %v2176 = vpack.c.b16 %v1738, %v1732
        %v2177 = vpack.c.b16 %v1745, %v1739
        %v2178 = vpack.c.b16 %v1746, %v1740
        %v2179 = vpack.c.b16 %v1747, %v1741
        %v2180 = vpack.c.b16 %v1748, %v1742
        %v2181 = vpack.c.b16 %v1749, %v1743
        %v2182 = vpack.c.b16 %v1750, %v1744
        %v2183 = vpack.c.b16 %v1757, %v1751
        %v2184 = vpack.c.b16 %v1758, %v1752
        %v2185 = vpack.c.b16 %v1759, %v1753
        %v2186 = vpack.c.b16 %v1760, %v1754
        %v2187 = vpack.c.b16 %v1761, %v1755
        %v2188 = vpack.c.b16 %v1762, %v1756
        %v2189 = vpack.c.b16 %v1769, %v1763
        %v2190 = vpack.c.b16 %v1770, %v1764
        %v2191 = vpack.c.b16 %v1771, %v1765
        %v2192 = vpack.c.b16 %v1772, %v1766
        %v2193 = vpack.c.b16 %v1773, %v1767
        %v2194 = vpack.c.b16 %v1774, %v1768
        %v2195 = vpack.c.b16 %v1781, %v1775
        %v2196 = vpack.c.b16 %v1782, %v1776
        %v2197 = vpack.c.b16 %v1783, %v1777
        %v2198 = vpack.c.b16 %v1784, %v1778
        %v2199 = vpack.c.b16 %v1785, %v1779
        %v2200 = vpack.c.b16 %v1786, %v1780
        %v2201 = vpack.c.b16 %v1793, %v1787
        %v2202 = vpack.c.b16 %v1794, %v1788
        %v2203 = vpack.c.b16 %v1795, %v1789
        %v2204 = vpack.c.b16 %v1796, %v1790
        %v2205 = vpack.c.b16 %v1797, %v1791
        %v2206 = vpack.c.b16 %v1798, %v1792
        %v2207 = vpack.c.b16 %v1805, %v1799
        %v2208 = vpack.c.b16 %v1806, %v1800
        %v2209 = vpack.c.b16 %v1807, %v1801
        %v2210 = vpack.c.b16 %v1808, %v1802
        %v2211 = vpack.c.b16 %v1809, %v1803
        %v2212 = vpack.c.b16 %v1810, %v1804
        %v2213 = vpack.c.b16 %v1817, %v1811
        %v2214 = vpack.c.b16 %v1818, %v1812
        %v2215 = vpack.c.b16 %v1819, %v1813
        %v2216 = vpack.c.b16 %v1820, %v1814
        %v2217 = vpack.c.b16 %v1821, %v1815
        %v2218 = vpack.c.b16 %v1822, %v1816
        %v2219 = vpack.c.b16 %v1829, %v1823
        %v2220 = vpack.c.b16 %v1830, %v1824
        %v2221 = vpack.c.b16 %v1831, %v1825
        %v2222 = vpack.c.b16 %v1832, %v1826
        %v2223 = vpack.c.b16 %v1833, %v1827
        %v2224 = vpack.c.b16 %v1834, %v1828
        %v2225 = vpack.c.b16 %v1841, %v1835
        %v2226 = vpack.c.b16 %v1842, %v1836
        %v2227 = vpack.c.b16 %v1843, %v1837
        %v2228 = vpack.c.b16 %v1844, %v1838
        %v2229 = vpack.c.b16 %v1845, %v1839
        %v2230 = vpack.c.b16 %v1846, %v1840
        %2615 = vmatprep.subr.bf16.mxu0 %v1890
        %2616 = vmatpush1.bf16.msra.mxu0 %v1889
        %2617 = vmatprep.subr.bf16.mxu0 %v1884
        %2618 = vmatpush1.bf16.msra.mxu0 %v1883
        %2619 = vmatprep.subr.bf16.mxu0 %v1878
        %2620 = vmatpush1.bf16.msra.mxu0 %v1877
        %2621 = vmatprep.subr.bf16.mxu0 %v1872
        %2622 = vmatpush1.bf16.msra.mxu0 %v1871
        %2623 = vmatprep.subr.bf16.mxu0 %v1866
        %2624 = vmatpush1.bf16.msra.mxu0 %v1865
        %2625 = vmatprep.subr.bf16.mxu0 %v1860
        %2626 = vmatpush1.bf16.msra.mxu0 %v1859
        %2627 = vmatprep.subr.bf16.mxu0 %v1854
        %2628 = vmatpush1.bf16.msra.mxu0 %v1853
        %2629 = vmatprep.subr.bf16.mxu0 %v1848
        %2630 = vmatpush1.bf16.msra.mxu0 %v1847
        %2631 = vmatprep.subr.bf16.mxu0 %v1938
        %2632 = vmatpush2.bf16.msra.mxu0 %v1937
        %2633 = vmatprep.subr.bf16.mxu0 %v1932
        %2634 = vmatpush2.bf16.msra.mxu0 %v1931
        %2635 = vmatprep.subr.bf16.mxu0 %v1926
        %2636 = vmatpush2.bf16.msra.mxu0 %v1925
        %2637 = vmatprep.subr.bf16.mxu0 %v1920
        %2638 = vmatpush2.bf16.msra.mxu0 %v1919
        %2639 = vmatprep.subr.bf16.mxu0 %v1914
        %2640 = vmatpush2.bf16.msra.mxu0 %v1913
        %2641 = vmatprep.subr.bf16.mxu0 %v1908
        %2642 = vmatpush2.bf16.msra.mxu0 %v1907
        %2643 = vmatprep.subr.bf16.mxu0 %v1902
        %2644 = vmatpush2.bf16.msra.mxu0 %v1901
        %2645 = vmatprep.subr.bf16.mxu0 %v1896
        %2646 = vmatpush2.bf16.msra.mxu0 %v1895
        %2647 = vmatprep.mubr.bf16.mxu0 %v680
        %2648 = vmatmul.mubr.bf16.gmra.mxu0 %v679
        %v2649 = vpop.f32.mrf.mxu0
        %v2650 = vadd.f32 0.0, %v2649
        %v2651 = vpop.f32.mrf.mxu0
        %v2652 = vadd.f32 0.0, %v2651
        %v2653 = vpop.f32.mrf.mxu0
        %v2654 = vpop.f32.mrf.mxu0
        %2655 = vdwg.mxu0
        %2656 = vmatprep.subr.bf16.mxu0 %v1986
        %2657 = vmatpush1.bf16.msra.mxu0 %v1985
        %2658 = vmatprep.subr.bf16.mxu0 %v1980
        %2659 = vmatpush1.bf16.msra.mxu0 %v1979
        %2660 = vmatprep.subr.bf16.mxu0 %v1974
        %2661 = vmatpush1.bf16.msra.mxu0 %v1973
        %2662 = vmatprep.subr.bf16.mxu0 %v1968
        %2663 = vmatpush1.bf16.msra.mxu0 %v1967
        %2664 = vmatprep.subr.bf16.mxu0 %v1962
        %2665 = vmatpush1.bf16.msra.mxu0 %v1961
        %2666 = vmatprep.subr.bf16.mxu0 %v1956
        %2667 = vmatpush1.bf16.msra.mxu0 %v1955
        %2668 = vmatprep.subr.bf16.mxu0 %v1950
        %2669 = vmatpush1.bf16.msra.mxu0 %v1949
        %2670 = vmatprep.subr.bf16.mxu0 %v1944
        %2671 = vmatpush1.bf16.msra.mxu0 %v1943
        %2672 = vmatprep.subr.bf16.mxu0 %v2034
        %2673 = vmatpush2.bf16.msra.mxu0 %v2033
        %2674 = vmatprep.subr.bf16.mxu0 %v2028
        %2675 = vmatpush2.bf16.msra.mxu0 %v2027
        %2676 = vmatprep.subr.bf16.mxu0 %v2022
        %2677 = vmatpush2.bf16.msra.mxu0 %v2021
        %2678 = vmatprep.subr.bf16.mxu0 %v2016
        %2679 = vmatpush2.bf16.msra.mxu0 %v2015
        %2680 = vmatprep.subr.bf16.mxu0 %v2010
        %2681 = vmatpush2.bf16.msra.mxu0 %v2009
        %2682 = vmatprep.subr.bf16.mxu0 %v2004
        %2683 = vmatpush2.bf16.msra.mxu0 %v2003
        %2684 = vmatprep.subr.bf16.mxu0 %v1998
        %2685 = vmatpush2.bf16.msra.mxu0 %v1997
        %2686 = vmatprep.subr.bf16.mxu0 %v1992
        %2687 = vmatpush2.bf16.msra.mxu0 %v1991
        %2688 = vmatprep.mubr.bf16.mxu0 %v682
        %2689 = vmatmul.mubr.bf16.gmra.mxu0 %v681
        %v2690 = vpop.f32.mrf.mxu0
        %v2691 = vadd.f32 %v2650, %v2690
        %v2692 = vpop.f32.mrf.mxu0
        %v2693 = vadd.f32 %v2652, %v2692
        %v2694 = vpop.f32.mrf.mxu0
        %v2695 = vpop.f32.mrf.mxu0
        %2696 = vdwg.mxu0
        %2697 = vmatprep.subr.bf16.mxu0 %v2082
        %2698 = vmatpush1.bf16.msra.mxu0 %v2081
        %2699 = vmatprep.subr.bf16.mxu0 %v2076
        %2700 = vmatpush1.bf16.msra.mxu0 %v2075
        %2701 = vmatprep.subr.bf16.mxu0 %v2070
        %2702 = vmatpush1.bf16.msra.mxu0 %v2069
        %2703 = vmatprep.subr.bf16.mxu0 %v2064
        %2704 = vmatpush1.bf16.msra.mxu0 %v2063
        %2705 = vmatprep.subr.bf16.mxu0 %v2058
        %2706 = vmatpush1.bf16.msra.mxu0 %v2057
        %2707 = vmatprep.subr.bf16.mxu0 %v2052
        %2708 = vmatpush1.bf16.msra.mxu0 %v2051
        %2709 = vmatprep.subr.bf16.mxu0 %v2046
        %2710 = vmatpush1.bf16.msra.mxu0 %v2045
        %2711 = vmatprep.subr.bf16.mxu0 %v2040
        %2712 = vmatpush1.bf16.msra.mxu0 %v2039
        %2713 = vmatprep.subr.bf16.mxu0 %v2130
        %2714 = vmatpush2.bf16.msra.mxu0 %v2129
        %2715 = vmatprep.subr.bf16.mxu0 %v2124
        %2716 = vmatpush2.bf16.msra.mxu0 %v2123
        %2717 = vmatprep.subr.bf16.mxu0 %v2118
        %2718 = vmatpush2.bf16.msra.mxu0 %v2117
        %2719 = vmatprep.subr.bf16.mxu0 %v2112
        %2720 = vmatpush2.bf16.msra.mxu0 %v2111
        %2721 = vmatprep.subr.bf16.mxu0 %v2106
        %2722 = vmatpush2.bf16.msra.mxu0 %v2105
        %2723 = vmatprep.subr.bf16.mxu0 %v2100
        %2724 = vmatpush2.bf16.msra.mxu0 %v2099
        %2725 = vmatprep.subr.bf16.mxu0 %v2094
        %2726 = vmatpush2.bf16.msra.mxu0 %v2093
        %2727 = vmatprep.subr.bf16.mxu0 %v2088
        %2728 = vmatpush2.bf16.msra.mxu0 %v2087
        %2729 = vmatprep.mubr.bf16.mxu0 %v684
        %2730 = vmatmul.mubr.bf16.gmra.mxu0 %v683
        %v2731 = vpop.f32.mrf.mxu0
        %v2732 = vadd.f32 %v2691, %v2731
        %v2733 = vpop.f32.mrf.mxu0
        %v2734 = vadd.f32 %v2693, %v2733
        %v2735 = vpop.f32.mrf.mxu0
        %v2736 = vpop.f32.mrf.mxu0
        %2737 = vdwg.mxu0
        %2738 = vmatprep.subr.bf16.mxu0 %v2178
        %2739 = vmatpush1.bf16.msra.mxu0 %v2177
        %2740 = vmatprep.subr.bf16.mxu0 %v2172
        %2741 = vmatpush1.bf16.msra.mxu0 %v2171
        %2742 = vmatprep.subr.bf16.mxu0 %v2166
        %2743 = vmatpush1.bf16.msra.mxu0 %v2165
        %2744 = vmatprep.subr.bf16.mxu0 %v2160
        %2745 = vmatpush1.bf16.msra.mxu0 %v2159
        %2746 = vmatprep.subr.bf16.mxu0 %v2154
        %2747 = vmatpush1.bf16.msra.mxu0 %v2153
        %2748 = vmatprep.subr.bf16.mxu0 %v2148
        %2749 = vmatpush1.bf16.msra.mxu0 %v2147
        %2750 = vmatprep.subr.bf16.mxu0 %v2142
        %2751 = vmatpush1.bf16.msra.mxu0 %v2141
        %2752 = vmatprep.subr.bf16.mxu0 %v2136
        %2753 = vmatpush1.bf16.msra.mxu0 %v2135
        %2754 = vmatprep.subr.bf16.mxu0 %v2226
        %2755 = vmatpush2.bf16.msra.mxu0 %v2225
        %2756 = vmatprep.subr.bf16.mxu0 %v2220
        %2757 = vmatpush2.bf16.msra.mxu0 %v2219
        %2758 = vmatprep.subr.bf16.mxu0 %v2214
        %2759 = vmatpush2.bf16.msra.mxu0 %v2213
        %2760 = vmatprep.subr.bf16.mxu0 %v2208
        %2761 = vmatpush2.bf16.msra.mxu0 %v2207
        %2762 = vmatprep.subr.bf16.mxu0 %v2202
        %2763 = vmatpush2.bf16.msra.mxu0 %v2201
        %2764 = vmatprep.subr.bf16.mxu0 %v2196
        %2765 = vmatpush2.bf16.msra.mxu0 %v2195
        %2766 = vmatprep.subr.bf16.mxu0 %v2190
        %2767 = vmatpush2.bf16.msra.mxu0 %v2189
        %2768 = vmatprep.subr.bf16.mxu0 %v2184
        %2769 = vmatpush2.bf16.msra.mxu0 %v2183
        %2770 = vmatprep.mubr.bf16.mxu0 %v686
        %2771 = vmatmul.mubr.bf16.gmra.mxu0 %v685
        %v2772 = vpop.f32.mrf.mxu0
        %v2773 = vadd.f32 %v2732, %v2772
        %v2774 = vpop.f32.mrf.mxu0
        %v2775 = vadd.f32 %v2734, %v2774
        %v2776 = vpop.f32.mrf.mxu0
        %v2777 = vpop.f32.mrf.mxu0
        %2778 = vdwg.mxu0
        %2779 = vmatprep.subr.bf16.mxu0 %v1892
        %2780 = vmatpush1.bf16.msra.mxu0 %v1891
        %2781 = vmatprep.subr.bf16.mxu0 %v1886
        %2782 = vmatpush1.bf16.msra.mxu0 %v1885
        %2783 = vmatprep.subr.bf16.mxu0 %v1880
        %2784 = vmatpush1.bf16.msra.mxu0 %v1879
        %2785 = vmatprep.subr.bf16.mxu0 %v1874
        %2786 = vmatpush1.bf16.msra.mxu0 %v1873
        %2787 = vmatprep.subr.bf16.mxu0 %v1868
        %2788 = vmatpush1.bf16.msra.mxu0 %v1867
        %2789 = vmatprep.subr.bf16.mxu0 %v1862
        %2790 = vmatpush1.bf16.msra.mxu0 %v1861
        %2791 = vmatprep.subr.bf16.mxu0 %v1856
        %2792 = vmatpush1.bf16.msra.mxu0 %v1855
        %2793 = vmatprep.subr.bf16.mxu0 %v1850
        %2794 = vmatpush1.bf16.msra.mxu0 %v1849
        %2795 = vmatprep.subr.bf16.mxu0 %v1940
        %2796 = vmatpush2.bf16.msra.mxu0 %v1939
        %2797 = vmatprep.subr.bf16.mxu0 %v1934
        %2798 = vmatpush2.bf16.msra.mxu0 %v1933
        %2799 = vmatprep.subr.bf16.mxu0 %v1928
        %2800 = vmatpush2.bf16.msra.mxu0 %v1927
        %2801 = vmatprep.subr.bf16.mxu0 %v1922
        %2802 = vmatpush2.bf16.msra.mxu0 %v1921
        %2803 = vmatprep.subr.bf16.mxu0 %v1916
        %2804 = vmatpush2.bf16.msra.mxu0 %v1915
        %2805 = vmatprep.subr.bf16.mxu0 %v1910
        %2806 = vmatpush2.bf16.msra.mxu0 %v1909
        %2807 = vmatprep.subr.bf16.mxu0 %v1904
        %2808 = vmatpush2.bf16.msra.mxu0 %v1903
        %2809 = vmatprep.subr.bf16.mxu0 %v1898
        %2810 = vmatpush2.bf16.msra.mxu0 %v1897
        %2811 = vmatprep.mubr.bf16.mxu0 %v680
        %2812 = vmatmul.mubr.bf16.gmra.mxu0 %v679
        %v2813 = vpop.f32.mrf.mxu0
        %v2814 = vadd.f32 0.0, %v2813
        %v2815 = vpop.f32.mrf.mxu0
        %v2816 = vadd.f32 0.0, %v2815
        %v2817 = vpop.f32.mrf.mxu0
        %v2818 = vpop.f32.mrf.mxu0
        %2819 = vdwg.mxu0
        %2820 = vmatprep.subr.bf16.mxu0 %v1988
        %2821 = vmatpush1.bf16.msra.mxu0 %v1987
        %2822 = vmatprep.subr.bf16.mxu0 %v1982
        %2823 = vmatpush1.bf16.msra.mxu0 %v1981
        %2824 = vmatprep.subr.bf16.mxu0 %v1976
        %2825 = vmatpush1.bf16.msra.mxu0 %v1975
        %2826 = vmatprep.subr.bf16.mxu0 %v1970
        %2827 = vmatpush1.bf16.msra.mxu0 %v1969
        %2828 = vmatprep.subr.bf16.mxu0 %v1964
        %2829 = vmatpush1.bf16.msra.mxu0 %v1963
        %2830 = vmatprep.subr.bf16.mxu0 %v1958
        %2831 = vmatpush1.bf16.msra.mxu0 %v1957
        %2832 = vmatprep.subr.bf16.mxu0 %v1952
        %2833 = vmatpush1.bf16.msra.mxu0 %v1951
        %2834 = vmatprep.subr.bf16.mxu0 %v1946
        %2835 = vmatpush1.bf16.msra.mxu0 %v1945
        %2836 = vmatprep.subr.bf16.mxu0 %v2036
        %2837 = vmatpush2.bf16.msra.mxu0 %v2035
        %2838 = vmatprep.subr.bf16.mxu0 %v2030
        %2839 = vmatpush2.bf16.msra.mxu0 %v2029
        %2840 = vmatprep.subr.bf16.mxu0 %v2024
        %2841 = vmatpush2.bf16.msra.mxu0 %v2023
        %2842 = vmatprep.subr.bf16.mxu0 %v2018
        %2843 = vmatpush2.bf16.msra.mxu0 %v2017
        %2844 = vmatprep.subr.bf16.mxu0 %v2012
        %2845 = vmatpush2.bf16.msra.mxu0 %v2011
        %2846 = vmatprep.subr.bf16.mxu0 %v2006
        %2847 = vmatpush2.bf16.msra.mxu0 %v2005
        %2848 = vmatprep.subr.bf16.mxu0 %v2000
        %2849 = vmatpush2.bf16.msra.mxu0 %v1999
        %2850 = vmatprep.subr.bf16.mxu0 %v1994
        %2851 = vmatpush2.bf16.msra.mxu0 %v1993
        %2852 = vmatprep.mubr.bf16.mxu0 %v682
        %2853 = vmatmul.mubr.bf16.gmra.mxu0 %v681
        %v2854 = vpop.f32.mrf.mxu0
        %v2855 = vadd.f32 %v2814, %v2854
        %v2856 = vpop.f32.mrf.mxu0
        %v2857 = vadd.f32 %v2816, %v2856
        %v2858 = vpop.f32.mrf.mxu0
        %v2859 = vpop.f32.mrf.mxu0
        %2860 = vdwg.mxu0
        %2861 = vmatprep.subr.bf16.mxu0 %v2084
        %2862 = vmatpush1.bf16.msra.mxu0 %v2083
        %2863 = vmatprep.subr.bf16.mxu0 %v2078
        %2864 = vmatpush1.bf16.msra.mxu0 %v2077
        %2865 = vmatprep.subr.bf16.mxu0 %v2072
        %2866 = vmatpush1.bf16.msra.mxu0 %v2071
        %2867 = vmatprep.subr.bf16.mxu0 %v2066
        %2868 = vmatpush1.bf16.msra.mxu0 %v2065
        %2869 = vmatprep.subr.bf16.mxu0 %v2060
        %2870 = vmatpush1.bf16.msra.mxu0 %v2059
        %2871 = vmatprep.subr.bf16.mxu0 %v2054
        %2872 = vmatpush1.bf16.msra.mxu0 %v2053
        %2873 = vmatprep.subr.bf16.mxu0 %v2048
        %2874 = vmatpush1.bf16.msra.mxu0 %v2047
        %2875 = vmatprep.subr.bf16.mxu0 %v2042
        %2876 = vmatpush1.bf16.msra.mxu0 %v2041
        %2877 = vmatprep.subr.bf16.mxu0 %v2132
        %2878 = vmatpush2.bf16.msra.mxu0 %v2131
        %2879 = vmatprep.subr.bf16.mxu0 %v2126
        %2880 = vmatpush2.bf16.msra.mxu0 %v2125
        %2881 = vmatprep.subr.bf16.mxu0 %v2120
        %2882 = vmatpush2.bf16.msra.mxu0 %v2119
        %2883 = vmatprep.subr.bf16.mxu0 %v2114
        %2884 = vmatpush2.bf16.msra.mxu0 %v2113
        %2885 = vmatprep.subr.bf16.mxu0 %v2108
        %2886 = vmatpush2.bf16.msra.mxu0 %v2107
        %2887 = vmatprep.subr.bf16.mxu0 %v2102
        %2888 = vmatpush2.bf16.msra.mxu0 %v2101
        %2889 = vmatprep.subr.bf16.mxu0 %v2096
        %2890 = vmatpush2.bf16.msra.mxu0 %v2095
        %2891 = vmatprep.subr.bf16.mxu0 %v2090
        %2892 = vmatpush2.bf16.msra.mxu0 %v2089
        %2893 = vmatprep.mubr.bf16.mxu0 %v684
        %2894 = vmatmul.mubr.bf16.gmra.mxu0 %v683
        %v2895 = vpop.f32.mrf.mxu0
        %v2896 = vadd.f32 %v2855, %v2895
        %v2897 = vpop.f32.mrf.mxu0
        %v2898 = vadd.f32 %v2857, %v2897
        %v2899 = vpop.f32.mrf.mxu0
        %v2900 = vpop.f32.mrf.mxu0
        %2901 = vdwg.mxu0
        %2902 = vmatprep.subr.bf16.mxu0 %v2180
        %2903 = vmatpush1.bf16.msra.mxu0 %v2179
        %2904 = vmatprep.subr.bf16.mxu0 %v2174
        %2905 = vmatpush1.bf16.msra.mxu0 %v2173
        %2906 = vmatprep.subr.bf16.mxu0 %v2168
        %2907 = vmatpush1.bf16.msra.mxu0 %v2167
        %2908 = vmatprep.subr.bf16.mxu0 %v2162
        %2909 = vmatpush1.bf16.msra.mxu0 %v2161
        %2910 = vmatprep.subr.bf16.mxu0 %v2156
        %2911 = vmatpush1.bf16.msra.mxu0 %v2155
        %2912 = vmatprep.subr.bf16.mxu0 %v2150
        %2913 = vmatpush1.bf16.msra.mxu0 %v2149
        %2914 = vmatprep.subr.bf16.mxu0 %v2144
        %2915 = vmatpush1.bf16.msra.mxu0 %v2143
        %2916 = vmatprep.subr.bf16.mxu0 %v2138
        %2917 = vmatpush1.bf16.msra.mxu0 %v2137
        %2918 = vmatprep.subr.bf16.mxu0 %v2228
        %2919 = vmatpush2.bf16.msra.mxu0 %v2227
        %2920 = vmatprep.subr.bf16.mxu0 %v2222
        %2921 = vmatpush2.bf16.msra.mxu0 %v2221
        %2922 = vmatprep.subr.bf16.mxu0 %v2216
        %2923 = vmatpush2.bf16.msra.mxu0 %v2215
        %2924 = vmatprep.subr.bf16.mxu0 %v2210
        %2925 = vmatpush2.bf16.msra.mxu0 %v2209
        %2926 = vmatprep.subr.bf16.mxu0 %v2204
        %2927 = vmatpush2.bf16.msra.mxu0 %v2203
        %2928 = vmatprep.subr.bf16.mxu0 %v2198
        %2929 = vmatpush2.bf16.msra.mxu0 %v2197
        %2930 = vmatprep.subr.bf16.mxu0 %v2192
        %2931 = vmatpush2.bf16.msra.mxu0 %v2191
        %2932 = vmatprep.subr.bf16.mxu0 %v2186
        %2933 = vmatpush2.bf16.msra.mxu0 %v2185
        %2934 = vmatprep.mubr.bf16.mxu0 %v686
        %2935 = vmatmul.mubr.bf16.gmra.mxu0 %v685
        %v2936 = vpop.f32.mrf.mxu0
        %v2937 = vadd.f32 %v2896, %v2936
        %v2938 = vpop.f32.mrf.mxu0
        %v2939 = vadd.f32 %v2898, %v2938
        %v2940 = vpop.f32.mrf.mxu0
        %v2941 = vpop.f32.mrf.mxu0
        %2942 = vdwg.mxu0
        %2943 = vmatprep.subr.bf16.mxu0 %v1894
        %2944 = vmatpush1.bf16.msra.mxu0 %v1893
        %2945 = vmatprep.subr.bf16.mxu0 %v1888
        %2946 = vmatpush1.bf16.msra.mxu0 %v1887
        %2947 = vmatprep.subr.bf16.mxu0 %v1882
        %2948 = vmatpush1.bf16.msra.mxu0 %v1881
        %2949 = vmatprep.subr.bf16.mxu0 %v1876
        %2950 = vmatpush1.bf16.msra.mxu0 %v1875
        %2951 = vmatprep.subr.bf16.mxu0 %v1870
        %2952 = vmatpush1.bf16.msra.mxu0 %v1869
        %2953 = vmatprep.subr.bf16.mxu0 %v1864
        %2954 = vmatpush1.bf16.msra.mxu0 %v1863
        %2955 = vmatprep.subr.bf16.mxu0 %v1858
        %2956 = vmatpush1.bf16.msra.mxu0 %v1857
        %2957 = vmatprep.subr.bf16.mxu0 %v1852
        %2958 = vmatpush1.bf16.msra.mxu0 %v1851
        %2959 = vmatprep.subr.bf16.mxu0 %v1942
        %2960 = vmatpush2.bf16.msra.mxu0 %v1941
        %2961 = vmatprep.subr.bf16.mxu0 %v1936
        %2962 = vmatpush2.bf16.msra.mxu0 %v1935
        %2963 = vmatprep.subr.bf16.mxu0 %v1930
        %2964 = vmatpush2.bf16.msra.mxu0 %v1929
        %2965 = vmatprep.subr.bf16.mxu0 %v1924
        %2966 = vmatpush2.bf16.msra.mxu0 %v1923
        %2967 = vmatprep.subr.bf16.mxu0 %v1918
        %2968 = vmatpush2.bf16.msra.mxu0 %v1917
        %2969 = vmatprep.subr.bf16.mxu0 %v1912
        %2970 = vmatpush2.bf16.msra.mxu0 %v1911
        %2971 = vmatprep.subr.bf16.mxu0 %v1906
        %2972 = vmatpush2.bf16.msra.mxu0 %v1905
        %2973 = vmatprep.subr.bf16.mxu0 %v1900
        %2974 = vmatpush2.bf16.msra.mxu0 %v1899
        %2975 = vmatprep.mubr.bf16.mxu0 %v680
        %2976 = vmatmul.mubr.bf16.gmra.mxu0 %v679
        %v2977 = vpop.f32.mrf.mxu0
        %v2978 = vadd.f32 0.0, %v2977
        %v2979 = vpop.f32.mrf.mxu0
        %v2980 = vadd.f32 0.0, %v2979
        %v2981 = vpop.f32.mrf.mxu0
        %v2982 = vpop.f32.mrf.mxu0
        %2983 = vdwg.mxu0
        %2984 = vmatprep.subr.bf16.mxu0 %v1990
        %2985 = vmatpush1.bf16.msra.mxu0 %v1989
        %2986 = vmatprep.subr.bf16.mxu0 %v1984
        %2987 = vmatpush1.bf16.msra.mxu0 %v1983
        %2988 = vmatprep.subr.bf16.mxu0 %v1978
        %2989 = vmatpush1.bf16.msra.mxu0 %v1977
        %2990 = vmatprep.subr.bf16.mxu0 %v1972
        %2991 = vmatpush1.bf16.msra.mxu0 %v1971
        %2992 = vmatprep.subr.bf16.mxu0 %v1966
        %2993 = vmatpush1.bf16.msra.mxu0 %v1965
        %2994 = vmatprep.subr.bf16.mxu0 %v1960
        %2995 = vmatpush1.bf16.msra.mxu0 %v1959
        %2996 = vmatprep.subr.bf16.mxu0 %v1954
        %2997 = vmatpush1.bf16.msra.mxu0 %v1953
        %2998 = vmatprep.subr.bf16.mxu0 %v1948
        %2999 = vmatpush1.bf16.msra.mxu0 %v1947
        %3000 = vmatprep.subr.bf16.mxu0 %v2038
        %3001 = vmatpush2.bf16.msra.mxu0 %v2037
        %3002 = vmatprep.subr.bf16.mxu0 %v2032
        %3003 = vmatpush2.bf16.msra.mxu0 %v2031
        %3004 = vmatprep.subr.bf16.mxu0 %v2026
        %3005 = vmatpush2.bf16.msra.mxu0 %v2025
        %3006 = vmatprep.subr.bf16.mxu0 %v2020
        %3007 = vmatpush2.bf16.msra.mxu0 %v2019
        %3008 = vmatprep.subr.bf16.mxu0 %v2014
        %3009 = vmatpush2.bf16.msra.mxu0 %v2013
        %3010 = vmatprep.subr.bf16.mxu0 %v2008
        %3011 = vmatpush2.bf16.msra.mxu0 %v2007
        %3012 = vmatprep.subr.bf16.mxu0 %v2002
        %3013 = vmatpush2.bf16.msra.mxu0 %v2001
        %3014 = vmatprep.subr.bf16.mxu0 %v1996
        %3015 = vmatpush2.bf16.msra.mxu0 %v1995
        %3016 = vmatprep.mubr.bf16.mxu0 %v682
        %3017 = vmatmul.mubr.bf16.gmra.mxu0 %v681
        %v3018 = vpop.f32.mrf.mxu0
        %v3019 = vadd.f32 %v2978, %v3018
        %v3020 = vpop.f32.mrf.mxu0
        %v3021 = vadd.f32 %v2980, %v3020
        %v3022 = vpop.f32.mrf.mxu0
        %v3023 = vpop.f32.mrf.mxu0
        %3024 = vdwg.mxu0
        %3025 = vmatprep.subr.bf16.mxu0 %v2086
        %3026 = vmatpush1.bf16.msra.mxu0 %v2085
        %3027 = vmatprep.subr.bf16.mxu0 %v2080
        %3028 = vmatpush1.bf16.msra.mxu0 %v2079
        %3029 = vmatprep.subr.bf16.mxu0 %v2074
        %3030 = vmatpush1.bf16.msra.mxu0 %v2073
        %3031 = vmatprep.subr.bf16.mxu0 %v2068
        %3032 = vmatpush1.bf16.msra.mxu0 %v2067
        %3033 = vmatprep.subr.bf16.mxu0 %v2062
        %3034 = vmatpush1.bf16.msra.mxu0 %v2061
        %3035 = vmatprep.subr.bf16.mxu0 %v2056
        %3036 = vmatpush1.bf16.msra.mxu0 %v2055
        %3037 = vmatprep.subr.bf16.mxu0 %v2050
        %3038 = vmatpush1.bf16.msra.mxu0 %v2049
        %3039 = vmatprep.subr.bf16.mxu0 %v2044
        %3040 = vmatpush1.bf16.msra.mxu0 %v2043
        %3041 = vmatprep.subr.bf16.mxu0 %v2134
        %3042 = vmatpush2.bf16.msra.mxu0 %v2133
        %3043 = vmatprep.subr.bf16.mxu0 %v2128
        %3044 = vmatpush2.bf16.msra.mxu0 %v2127
        %3045 = vmatprep.subr.bf16.mxu0 %v2122
        %3046 = vmatpush2.bf16.msra.mxu0 %v2121
        %3047 = vmatprep.subr.bf16.mxu0 %v2116
        %3048 = vmatpush2.bf16.msra.mxu0 %v2115
        %3049 = vmatprep.subr.bf16.mxu0 %v2110
        %3050 = vmatpush2.bf16.msra.mxu0 %v2109
        %3051 = vmatprep.subr.bf16.mxu0 %v2104
        %3052 = vmatpush2.bf16.msra.mxu0 %v2103
        %3053 = vmatprep.subr.bf16.mxu0 %v2098
        %3054 = vmatpush2.bf16.msra.mxu0 %v2097
        %3055 = vmatprep.subr.bf16.mxu0 %v2092
        %3056 = vmatpush2.bf16.msra.mxu0 %v2091
        %3057 = vmatprep.mubr.bf16.mxu0 %v684
        %3058 = vmatmul.mubr.bf16.gmra.mxu0 %v683
        %v3059 = vpop.f32.mrf.mxu0
        %v3060 = vadd.f32 %v3019, %v3059
        %v3061 = vpop.f32.mrf.mxu0
        %v3062 = vadd.f32 %v3021, %v3061
        %v3063 = vpop.f32.mrf.mxu0
        %v3064 = vpop.f32.mrf.mxu0
        %3065 = vdwg.mxu0
        %3066 = vmatprep.subr.bf16.mxu0 %v2182
        %3067 = vmatpush1.bf16.msra.mxu0 %v2181
        %3068 = vmatprep.subr.bf16.mxu0 %v2176
        %3069 = vmatpush1.bf16.msra.mxu0 %v2175
        %3070 = vmatprep.subr.bf16.mxu0 %v2170
        %3071 = vmatpush1.bf16.msra.mxu0 %v2169
        %3072 = vmatprep.subr.bf16.mxu0 %v2164
        %3073 = vmatpush1.bf16.msra.mxu0 %v2163
        %3074 = vmatprep.subr.bf16.mxu0 %v2158
        %3075 = vmatpush1.bf16.msra.mxu0 %v2157
        %3076 = vmatprep.subr.bf16.mxu0 %v2152
        %3077 = vmatpush1.bf16.msra.mxu0 %v2151
        %3078 = vmatprep.subr.bf16.mxu0 %v2146
        %3079 = vmatpush1.bf16.msra.mxu0 %v2145
        %3080 = vmatprep.subr.bf16.mxu0 %v2140
        %3081 = vmatpush1.bf16.msra.mxu0 %v2139
        %3082 = vmatprep.subr.bf16.mxu0 %v2230
        %3083 = vmatpush2.bf16.msra.mxu0 %v2229
        %3084 = vmatprep.subr.bf16.mxu0 %v2224
        %3085 = vmatpush2.bf16.msra.mxu0 %v2223
        %3086 = vmatprep.subr.bf16.mxu0 %v2218
        %3087 = vmatpush2.bf16.msra.mxu0 %v2217
        %3088 = vmatprep.subr.bf16.mxu0 %v2212
        %3089 = vmatpush2.bf16.msra.mxu0 %v2211
        %3090 = vmatprep.subr.bf16.mxu0 %v2206
        %3091 = vmatpush2.bf16.msra.mxu0 %v2205
        %3092 = vmatprep.subr.bf16.mxu0 %v2200
        %3093 = vmatpush2.bf16.msra.mxu0 %v2199
        %3094 = vmatprep.subr.bf16.mxu0 %v2194
        %3095 = vmatpush2.bf16.msra.mxu0 %v2193
        %3096 = vmatprep.subr.bf16.mxu0 %v2188
        %3097 = vmatpush2.bf16.msra.mxu0 %v2187
        %3098 = vmatprep.mubr.bf16.mxu0 %v686
        %3099 = vmatmul.mubr.bf16.gmra.mxu0 %v685
        %v3100 = vpop.f32.mrf.mxu0
        %v3101 = vadd.f32 %v3060, %v3100
        %v3102 = vpop.f32.mrf.mxu0
        %v3103 = vadd.f32 %v3062, %v3102
        %v3104 = vpop.f32.mrf.mxu0
        %v3105 = vpop.f32.mrf.mxu0
        %3106 = vdwg.mxu0
        %v3107 = vadd.f32 %v277, %v2773
        %v3108 = vadd.f32 %v278, %v2775
        %v3109 = vadd.f32 %v279, %v2937
        %v3110 = vadd.f32 %v280, %v2939
        %v3111 = vadd.f32 %v281, %v3101
        %v3112 = vadd.f32 %v282, %v3103
        %3113 = vst [vmem:[#allocation2] sm:$0xff] %v3107
        %3114 = vst [vmem:[#allocation2 + $0x8] sm:$0xff] %v3108
        %3115 = vst [vmem:[#allocation2 + $0x10] sm:$0xff] %v3109
        %3116 = vst [vmem:[#allocation2 + $0x18] sm:$0xff] %v3110
        %3117 = vst [vmem:[#allocation2 + $0x20] sm:$0xff] %v3111
        %3118 = vst [vmem:[#allocation2 + $0x28] sm:$0xff] %v3112
        // Predicated region
        $region45: #{pallas_linear.1} parent=31 // pred_check
          %p3119 = pneg %p258
        $region46: #{pallas_linear.1} parent=31 // pred_check_branch
          %3121 = sbr.rel (%p3119) target = $region48
        $region47: #{pallas_linear.1} parent=31 // pred_region
          %v3122 = vld [vmem:[#allocation2] sm:$0xff]
          %v3123 = vld [vmem:[#allocation2 + $0x8] sm:$0xff]
          %v3124 = vld [vmem:[#allocation2 + $0x10] sm:$0xff]
          %v3125 = vld [vmem:[#allocation2 + $0x18] sm:$0xff]
          %v3126 = vld [vmem:[#allocation2 + $0x20] sm:$0xff]
          %v3127 = vld [vmem:[#allocation2 + $0x28] sm:$0xff]
          %v3128 = vld [vmem:[%s255] sm:$0x3f]
          %v3129 = vunpack.c.l.bf16 %v3128
          %v3130 = vunpack.c.h.bf16 %v3128
          %v3133 = vlaneseq
          %v3134 = vshrl.u32 %v3133, 7
          %v3135 = vsub.s32 0, %v3134
          %v3136 = vrot.slane %v3129, %v3135
          %v3137 = vlaneseq
          %v3138 = vshrl.u32 %v3137, 7
          %v3139 = vsub.s32 2, %v3138
          %v3140 = vrot.slane %v3129, %v3139
          %v3141 = vlaneseq
          %v3142 = vshrl.u32 %v3141, 7
          %v3143 = vsub.s32 4, %v3142
          %v3144 = vrot.slane %v3129, %v3143
          %v3145 = vlaneseq
          %v3146 = vshrl.u32 %v3145, 7
          %v3147 = vsub.s32 6, %v3146
          %v3148 = vrot.slane %v3129, %v3147
          %v3149 = vlaneseq
          %v3150 = vshrl.u32 %v3149, 7
          %v3151 = vsub.s32 0, %v3150
          %v3152 = vrot.slane %v3130, %v3151
          %v3153 = vlaneseq
          %v3154 = vshrl.u32 %v3153, 7
          %v3155 = vsub.s32 2, %v3154
          %v3156 = vrot.slane %v3130, %v3155
          %v3163 = vlaneseq
          %v3164 = vshrl.u32 %v3163, 7
          %v3165 = vsub.s32 0, %v3164
          %v3166 = vrot.slane %v3136, %v3165
          %v3167 = vlaneseq
          %v3168 = vshrl.u32 %v3167, 7
          %v3169 = vsub.s32 0, %v3168
          %v3170 = vrot.slane %v3140, %v3169
          %v3171 = vlaneseq
          %v3172 = vshrl.u32 %v3171, 7
          %v3173 = vsub.s32 0, %v3172
          %v3174 = vrot.slane %v3144, %v3173
          %v3175 = vlaneseq
          %v3176 = vshrl.u32 %v3175, 7
          %v3177 = vsub.s32 0, %v3176
          %v3178 = vrot.slane %v3148, %v3177
          %v3179 = vlaneseq
          %v3180 = vshrl.u32 %v3179, 7
          %v3181 = vsub.s32 0, %v3180
          %v3182 = vrot.slane %v3152, %v3181
          %v3183 = vlaneseq
          %v3184 = vshrl.u32 %v3183, 7
          %v3185 = vsub.s32 0, %v3184
          %v3186 = vrot.slane %v3156, %v3185
          %v3187 = vadd.f32 %v3122, %v3166
          %v3188 = vadd.f32 %v3123, %v3170
          %v3189 = vadd.f32 %v3124, %v3174
          %v3190 = vadd.f32 %v3125, %v3178
          %v3191 = vadd.f32 %v3126, %v3182
          %v3192 = vadd.f32 %v3127, %v3186
          %v3193 = vpack.c.bf16 %v3187, %v3187
          %v3194 = vpack.c.bf16 %v3188, %v3188
          %v3195 = vpack.c.bf16 %v3189, %v3189
          %v3196 = vpack.c.bf16 %v3190, %v3190
          %v3197 = vpack.c.bf16 %v3191, %v3191
          %v3198 = vpack.c.bf16 %v3192, %v3192
          %v3205 = vunpack.c.l.b16 %v3193
          %v3206 = vunpack.c.l.b16 %v3194
          %v3207 = vunpack.c.l.b16 %v3195
          %v3208 = vunpack.c.l.b16 %v3196
          %v3209 = vunpack.c.l.b16 %v3197
          %v3210 = vunpack.c.l.b16 %v3198
          %v3211 = vpack.c.b16 %v3206, %v3205
          %v3212 = vpack.c.b16 %v3208, %v3207
          %v3213 = vpack.c.b16 %v3210, %v3209
          %3217 = vst [vmem:[%s249] sm:$0xff] %v3211
          %3218 = vst [vmem:[%s249 + $0x8] sm:$0xff] %v3212
          %3219 = vst [vmem:[%s249 + $0x10] sm:$0xff] %v3213
        $region48: #{pallas_linear.1} parent=31 // pred_fallthru
          _
        %s3220 = sand.u32 %s130, 1
        %s3221 = scalar_lea.sflag [#allocation5], %s3220
        %s3222 = sand.u32 %s130, 1
        %s3223 = smul.addr %s3222, 24
        %s3224 = scalar_lea.vmem [#allocation8], %s3223
        // Predicated region
        $region49: #{pallas_linear.1} parent=31 // pred_check
          %p3225 = pneg %p140
        $region50: #{pallas_linear.1} parent=31 // pred_check_branch
          %3227 = sbr.rel (%p3225) target = $region52
        $region51: #{pallas_linear.1} parent=31 // pred_region
          %s3228 = smul.u32 6, %s27
          %s3230 = ssub.s32 384, 384
          %3231 = vsyncadd %s3221, %s3230
          %s3232 = smul.addr %s26, 12
          %s3233 = sadd.s32 %s3228, %s3232
          %s3234 = smul.addr %s3233, 64
          %s3235 = scalar_lea.hbm %s3, %s3234
          %s3237 = sshll.u32 %s3224, 4
          %s3238 = int_to_ptr.vmem [resolvable:$true] %s3237
          %3240 = dma.vmem_to_hbm [thread:$0]  %s3238, 384, %s3235, %s3221
        $region52: #{pallas_linear.1} parent=31 // pred_fallthru
          _
      $region32: #{pallas_linear.1} parent=5 // pred_fallthru
        _
      %p3241 = scmp.le.s32.totalorder 2, %s16
      // Predicated region
      $region53: #{pallas_linear.1} parent=5 // pred_check
        %p3242 = pneg %p3241
      $region54: #{pallas_linear.1} parent=5 // pred_check_branch
        %3244 = sbr.rel (%p3242) target = $region56
      $region55: #{pallas_linear.1} parent=5 // pred_region
        %s3245 = ssub.s32 %s16, 2
        // Predicated region
        $region57: #{pallas_linear.1} parent=55 // pred_check
          %p3246 = pneg %p146
        $region58: #{pallas_linear.1} parent=55 // pred_check_branch
          %3248 = sbr.rel (%p3246) target = $region60
        $region59: #{pallas_linear.1} parent=55 // pred_region
          %s3249 = sand.u32 %s131, 1
          %s3250 = scalar_lea.sflag [#allocation5], %s3249
          %s3251 = sand.u32 %s131, 1
          %s3252 = smul.addr %s3251, 24
          %s3253 = scalar_lea.vmem [#allocation8], %s3252
          %3254 = dma.done %s3250, 384
        $region60: #{pallas_linear.1} parent=55 // pred_fallthru
          _
      $region56: #{pallas_linear.1} parent=5 // pred_fallthru
        _
    $region6: #{pallas_linear.1} parent=1 // loop_footer
      %s20 = sadd.s32 1, %s16
    $region7: #{pallas_linear.1} parent=1 // loop_footer_branch
      %15 = sbr.rel target = $region3
    $region8: #{pallas_linear.1} parent=1 // loop_exit
      _
    %3255 = vsyncpa [#allocation4], 1
    %s3256 = scalar_lea.sflag [#allocation4], 1
    %3257 = vsyncpa %s3256, 1
    %3258 = vsyncpa [#allocation7], 1
    %s3259 = scalar_lea.sflag [#allocation7], 1
    %3260 = vsyncpa %s3259, 1
    %3261 = vsyncpa [#allocation5], 1
    %s3262 = scalar_lea.sflag [#allocation5], 1
    %3263 = vsyncpa %s3262, 1

</llo_original>
